<compile_context>
chip_gen: v7x
topology: tpu7x:2x2x1
jax: 0.10.0
libtpu: 0.0.40
codegen_flags: <defaults>
</compile_context>

<pallas_src>
import jax
import jax.numpy as jnp
from jax.experimental import pallas as pl
from jax.experimental.pallas import tpu as pltpu


# ---------------------------------------------------------------------------
# Pallas kernels: (im2col-matmul) conv + folded-BN shift + ReLU (+ residual)
# BN scale is pre-folded into the bf16 weights, so the epilogue is +shift/ReLU/cast.
# ---------------------------------------------------------------------------
def _conv_bn_relu_kernel(p_ref, w_ref, b_ref, o_ref):
    # p_ref: [tm, K_pad] bf16   w_ref: [K_pad, C_pad] bf16   b_ref: [1, C_pad] f32
    acc = jnp.dot(p_ref[...], w_ref[...], preferred_element_type=jnp.float32)
    o_ref[...] = jnp.maximum(acc + b_ref[...], 0.0).astype(o_ref.dtype)


def _conv_bn_add_relu_kernel(p_ref, w_ref, b_ref, r_ref, o_ref):
    # r_ref: [tm, C_pad] bf16 residual, added in f32 before the ReLU.
    acc = jnp.dot(p_ref[...], w_ref[...], preferred_element_type=jnp.float32)
    acc = acc + b_ref[...] + r_ref[...].astype(jnp.float32)
    o_ref[...] = jnp.maximum(acc, 0.0).astype(o_ref.dtype)


# ---------------------------------------------------------------------------
# Glue: im2col patch extraction (plain JAX, fused under jit) + padded pallas_call
# ---------------------------------------------------------------------------
def _round_up(x, m):
    return (x + m - 1) // m * m


def _choose_tm(m):
    """Row tile: 512 when M is large, otherwise one single full-height step.

    Small M is NOT split into tiny sub-128-row steps: a 32-row matmul leaves the
    MXU mostly idle and still pays the ~0.35us per-step overhead, so one fuller
    step wins; megacore sharding only pays off once M is large (>= 2 steps of 512).
    """
    m16 = _round_up(max(m, 16), 16)
    return min(512, m16)


def _im2col(x_nhwc, kh, kw, stride, pad):
    n, h, w, c = x_nhwc.shape
    xp = jnp.pad(x_nhwc, ((0, 0), (pad, pad), (pad, pad), (0, 0)))
    oh = (h + 2 * pad - kh) // stride + 1
    ow = (w + 2 * pad - kw) // stride + 1
    cols = []
    for i in range(kh):
        for j in range(kw):
            cols.append(xp[:, i:i + stride * oh:stride, j:j + stride * ow:stride, :])
    patches = jnp.concatenate(cols, axis=-1)  # [N, OH, OW, KH*KW*C]
    return patches.reshape(n * oh * ow, kh * kw * c), (n, oh, ow)


def _patches_spec(tm, k_pad, n_steps):
    # 3-deep buffering on the patch stream hides DMA jitter once per-tile DMA and
    # MXU time are roughly balanced (most relevant on v5e). Only worthwhile with
    # more than one grid step.
    if n_steps > 1:
        try:
            return pl.BlockSpec((tm, k_pad), lambda i: (i, 0),
                                pipeline_mode=pl.Buffered(3))
        except TypeError:  # older jax without pipeline_mode kwarg
            pass
    return pl.BlockSpec((tm, k_pad), lambda i: (i, 0))


def conv_bn_act(x_nhwc, w, scale, shift, *, stride, pad, residual=None):
    """Fused conv + folded BatchNorm + ReLU as a Pallas im2col matmul.

    `x_nhwc` carries only *real* input channels; the contraction dim K = kh*kw*cin
    is padded to a multiple of 128 exactly once, after im2col.  The returned
    activation is bf16 with a lane-dense 128-padded channel dim (padded lanes are
    exactly zero); callers slice back to the real channel count before the next
    layer's im2col.  `residual`, if given, is a [N, OH, OW, C_pad] bf16 array
    (typically a previous conv_bn_act output) added before the ReLU.
    """
    kh, kw, cin, cout = w.shape
    assert x_nhwc.shape[-1] == cin
    C_pad = _round_up(cout, 128)

    # im2col in bf16 (halves the patch-matrix materialization traffic vs f32).
    patches, (n, oh, ow) = _im2col(x_nhwc.astype(jnp.bfloat16), kh, kw, stride, pad)
    M, K = patches.shape
    K_pad = _round_up(K, 128)
    tm = _choose_tm(M)
    M_pad = _round_up(_round_up(M, 16), tm)
    grid = (M_pad // tm,)

    p = jnp.pad(patches, ((0, M_pad - M), (0, K_pad - K)))

    # Fold the BN scale into the weights on the host; only "+ shift" stays in-kernel.
    w_f = w.astype(jnp.float32) * scale.astype(jnp.float32)[None, None, None, :]
    wmat = jnp.pad(w_f.reshape(K, cout),
                   ((0, K_pad - K), (0, C_pad - cout))).astype(jnp.bfloat16)
    b = jnp.pad(shift.astype(jnp.float32), (0, C_pad - cout)).reshape(1, C_pad)

    in_specs = [
        _patches_spec(tm, K_pad, grid[0]),
        pl.BlockSpec((K_pad, C_pad), lambda i: (0, 0)),
        pl.BlockSpec((1, C_pad), lambda i: (0, 0)),
    ]
    args = [p, wmat, b]
    kernel = _conv_bn_relu_kernel
    bytes_accessed = p.size * 2 + wmat.size * 2 + b.size * 4 + M_pad * C_pad * 2

    if residual is not None:
        assert residual.shape[-1] == C_pad
        r = residual.astype(jnp.bfloat16).reshape(-1, C_pad)
        assert r.shape[0] == M
        r = jnp.pad(r, ((0, M_pad - M), (0, 0)))
        in_specs.append(pl.BlockSpec((tm, C_pad), lambda i: (i, 0)))
        args.append(r)
        kernel = _conv_bn_add_relu_kernel
        bytes_accessed += r.size * 2

    out = pl.pallas_call(
        kernel,
        out_shape=jax.ShapeDtypeStruct((M_pad, C_pad), jnp.bfloat16),
        grid=grid,
        in_specs=in_specs,
        out_specs=pl.BlockSpec((tm, C_pad), lambda i: (i, 0)),
        compiler_params=pltpu.CompilerParams(dimension_semantics=("parallel",)),
        cost_estimate=pl.CostEstimate(
            flops=2 * M_pad * K_pad * C_pad,
            transcendentals=0,
            bytes_accessed=int(bytes_accessed)),
    )(*args)

    # Keep the lane-dense 128-padded channel width; only drop the padded rows.
    return out[:M].reshape(n, oh, ow, C_pad)


# ---------------------------------------------------------------------------
# Model: parameter init + forward_features
# ---------------------------------------------------------------------------
FEATURE_DIM = 64  # == TimmModel.get_feature_dim() for this synthetic backbone


def init_params(key):
    def conv_w(k, kh, kw, cin, cout):
        fan_in = kh * kw * cin
        return jax.random.normal(k, (kh, kw, cin, cout), jnp.float32) * (2.0 / fan_in) ** 0.5

    def bn_affine(k, c):
        k1, k2 = jax.random.split(k)
        scale = 1.0 + 0.1 * jax.random.normal(k1, (c,), jnp.float32)
        shift = 0.05 * jax.random.normal(k2, (c,), jnp.float32)
        return scale, shift

    ks = jax.random.split(key, 6)
    p = {}
    p["stem_w"] = conv_w(ks[0], 3, 3, 3, 32)
    p["stem_s"], p["stem_b"] = bn_affine(ks[1], 32)
    p["l1_w"] = conv_w(ks[2], 3, 3, 32, 64)
    p["l1_s"], p["l1_b"] = bn_affine(ks[3], 64)
    p["l2_w"] = conv_w(ks[4], 3, 3, 64, 64)
    p["l2_s"], p["l2_b"] = bn_affine(ks[5], 64)
    return p


def timm_forward_features(x_nchw, params):
    """Equivalent of TimmModel.forward(x): returns an NCHW spatial feature map (f32)."""
    c0 = params["l1_w"].shape[2]  # real stem output channels (32)
    c1 = params["l2_w"].shape[2]  # real layer-1 output channels (64)

    x = jnp.transpose(x_nchw, (0, 2, 3, 1))  # NCHW -> NHWC for the kernels
    h0 = conv_bn_act(x, params["stem_w"], params["stem_s"], params["stem_b"],
                     stride=2, pad=1)                    # [N, H/2, W/2, 128] bf16 (32 real)
    h1 = conv_bn_act(h0[..., :c0], params["l1_w"], params["l1_s"], params["l1_b"],
                     stride=2, pad=1)                    # [N, H/4, W/4, 128] bf16 (64 real)
    h2 = conv_bn_act(h1[..., :c1], params["l2_w"], params["l2_s"], params["l2_b"],
                     stride=1, pad=1, residual=h1)       # residual block
    h2 = h2[..., :FEATURE_DIM].astype(jnp.float32)       # real channels, f32 API dtype
    return jnp.transpose(h2, (0, 3, 1, 2))               # back to NCHW


def get_feature_dim():
    return FEATURE_DIM


if __name__ == "__main__":
    key = jax.random.PRNGKey(0)
    kp, kx = jax.random.split(key)
    params = init_params(kp)

    # Small analogue of the (2, 3, 256, 128) person-reid input: (2, 3, 32, 16), NCHW.
    x = jax.random.normal(kx, (2, 3, 32, 16), jnp.float32)

    forward = jax.jit(timm_forward_features)
    feats = jax.block_until_ready(forward(x, params))

    assert feats.shape == (2, FEATURE_DIM, 8, 4), feats.shape
    assert feats.dtype == jnp.float32
    assert bool(jnp.all(jnp.isfinite(feats)))
    print("KERNEL_OK")
</pallas_src>

<mosaic_0001>
module attributes {stable_mosaic.version = 11 : i64} {
  func.func @_conv_bn_relu_kernel(%arg0: i32, %arg1: memref<256x128xbf16, #tpu.memory_space<vmem>>, %arg2: memref<128x128xbf16, #tpu.memory_space<vmem>>, %arg3: memref<1x128xf32, #tpu.memory_space<vmem>>, %arg4: memref<256x128xbf16, #tpu.memory_space<vmem>>) attributes {dimension_semantics = [#tpu.dimension_semantics<parallel>], iteration_bounds = array<i64: 1>, scalar_prefetch = 0 : i64, scratch_operands = 0 : i64, tpu.core_type = #tpu.core_type<tc>, window_params = [{transform_indices = @transform_0, window_bounds = array<i64: 256, 128>}, {pipeline_mode = #tpu.pipeline_mode<synchronous>, transform_indices = @transform_1, window_bounds = array<i64: 128, 128>}, {pipeline_mode = #tpu.pipeline_mode<synchronous>, transform_indices = @transform_2, window_bounds = array<i64: 1, 128>}, {transform_indices = @transform_3, window_bounds = array<i64: 256, 128>}]} {
    %c0 = arith.constant 0 : index
    %c0_0 = arith.constant 0 : index
    %0 = vector.load %arg1[%c0, %c0_0] : memref<256x128xbf16, #tpu.memory_space<vmem>>, vector<256x128xbf16>
    %c0_1 = arith.constant 0 : index
    %c0_2 = arith.constant 0 : index
    %1 = vector.load %arg2[%c0_1, %c0_2] : memref<128x128xbf16, #tpu.memory_space<vmem>>, vector<128x128xbf16>
    %cst = arith.constant dense<0.000000e+00> : vector<256x128xf32>
    %2 = tpu.matmul %0, %1, %cst {dimension_numbers = #tpu.dot_dimension_numbers<[1], [0], [0], [1], [0, 0, 1, 1], [], []>} : vector<256x128xbf16>, vector<128x128xbf16>, vector<256x128xf32> -> vector<256x128xf32>
    %c0_3 = arith.constant 0 : index
    %c0_4 = arith.constant 0 : index
    %3 = vector.load %arg3[%c0_3, %c0_4] : memref<1x128xf32, #tpu.memory_space<vmem>>, vector<1x128xf32>
    %4 = vector.broadcast %3 : vector<1x128xf32> to vector<256x128xf32>
    %5 = arith.addf %2, %4 : vector<256x128xf32>
    %cst_5 = arith.constant 0.000000e+00 : f32
    %6 = vector.broadcast %cst_5 : f32 to vector<256x128xf32>
    %7 = arith.maximumf %5, %6 : vector<256x128xf32>
    %8 = arith.truncf %7 : vector<256x128xf32> to vector<256x128xbf16>
    %c0_6 = arith.constant 0 : index
    %c0_7 = arith.constant 0 : index
    %9 = vector.load %arg4[%c0_6, %c0_7] : memref<256x128xbf16, #tpu.memory_space<vmem>>, vector<256x128xbf16>
    tpu.vector_store %arg4[%c0_6, %c0_7], %8 {strides = array<i32>} : memref<256x128xbf16, #tpu.memory_space<vmem>>, vector<256x128xbf16>,
    return
  }
  func.func @transform_0(%arg0: i32) -> (i32, i32) {
    %c0_i32 = arith.constant 0 : i32
    %c0_i32_0 = arith.constant 0 : i32
    return %arg0, %c0_i32 : i32, i32
  }
  func.func @transform_1(%arg0: i32) -> (i32, i32) {
    %c0_i32 = arith.constant 0 : i32
    %c0_i32_0 = arith.constant 0 : i32
    %c0_i32_1 = arith.constant 0 : i32
    return %c0_i32, %c0_i32_0 : i32, i32
  }
  func.func @transform_2(%arg0: i32) -> (i32, i32) {
    %c0_i32 = arith.constant 0 : i32
    %c0_i32_0 = arith.constant 0 : i32
    %c0_i32_1 = arith.constant 0 : i32
    return %c0_i32, %c0_i32_0 : i32, i32
  }
  func.func @transform_3(%arg0: i32) -> (i32, i32) {
    %c0_i32 = arith.constant 0 : i32
    %c0_i32_0 = arith.constant 0 : i32
    return %arg0, %c0_i32 : i32, i32
  }
}

module attributes {stable_mosaic.version = 11 : i64} {
  func.func @_conv_bn_relu_kernel(%arg0: i32, %arg1: memref<64x384xbf16, #tpu.memory_space<vmem>>, %arg2: memref<384x128xbf16, #tpu.memory_space<vmem>>, %arg3: memref<1x128xf32, #tpu.memory_space<vmem>>, %arg4: memref<64x128xbf16, #tpu.memory_space<vmem>>) attributes {dimension_semantics = [#tpu.dimension_semantics<parallel>], iteration_bounds = array<i64: 1>, scalar_prefetch = 0 : i64, scratch_operands = 0 : i64, tpu.core_type = #tpu.core_type<tc>, window_params = [{transform_indices = @transform_0, window_bounds = array<i64: 64, 384>}, {pipeline_mode = #tpu.pipeline_mode<synchronous>, transform_indices = @transform_1, window_bounds = array<i64: 384, 128>}, {pipeline_mode = #tpu.pipeline_mode<synchronous>, transform_indices = @transform_2, window_bounds = array<i64: 1, 128>}, {transform_indices = @transform_3, window_bounds = array<i64: 64, 128>}]} {
    %c0 = arith.constant 0 : index
    %c0_0 = arith.constant 0 : index
    %0 = vector.load %arg1[%c0, %c0_0] : memref<64x384xbf16, #tpu.memory_space<vmem>>, vector<64x384xbf16>
    %c0_1 = arith.constant 0 : index
    %c0_2 = arith.constant 0 : index
    %1 = vector.load %arg2[%c0_1, %c0_2] : memref<384x128xbf16, #tpu.memory_space<vmem>>, vector<384x128xbf16>
    %cst = arith.constant dense<0.000000e+00> : vector<64x128xf32>
    %2 = tpu.matmul %0, %1, %cst {dimension_numbers = #tpu.dot_dimension_numbers<[1], [0], [0], [1], [0, 0, 1, 1], [], []>} : vector<64x384xbf16>, vector<384x128xbf16>, vector<64x128xf32> -> vector<64x128xf32>
    %c0_3 = arith.constant 0 : index
    %c0_4 = arith.constant 0 : index
    %3 = vector.load %arg3[%c0_3, %c0_4] : memref<1x128xf32, #tpu.memory_space<vmem>>, vector<1x128xf32>
    %4 = vector.broadcast %3 : vector<1x128xf32> to vector<64x128xf32>
    %5 = arith.addf %2, %4 : vector<64x128xf32>
    %cst_5 = arith.constant 0.000000e+00 : f32
    %6 = vector.broadcast %cst_5 : f32 to vector<64x128xf32>
    %7 = arith.maximumf %5, %6 : vector<64x128xf32>
    %8 = arith.truncf %7 : vector<64x128xf32> to vector<64x128xbf16>
    %c0_6 = arith.constant 0 : index
    %c0_7 = arith.constant 0 : index
    %9 = vector.load %arg4[%c0_6, %c0_7] : memref<64x128xbf16, #tpu.memory_space<vmem>>, vector<64x128xbf16>
    tpu.vector_store %arg4[%c0_6, %c0_7], %8 {strides = array<i32>} : memref<64x128xbf16, #tpu.memory_space<vmem>>, vector<64x128xbf16>,
    return
  }
  func.func @transform_0(%arg0: i32) -> (i32, i32) {
    %c0_i32 = arith.constant 0 : i32
    %c0_i32_0 = arith.constant 0 : i32
    return %arg0, %c0_i32 : i32, i32
  }
  func.func @transform_1(%arg0: i32) -> (i32, i32) {
    %c0_i32 = arith.constant 0 : i32
    %c0_i32_0 = arith.constant 0 : i32
    %c0_i32_1 = arith.constant 0 : i32
    return %c0_i32, %c0_i32_0 : i32, i32
  }
  func.func @transform_2(%arg0: i32) -> (i32, i32) {
    %c0_i32 = arith.constant 0 : i32
    %c0_i32_0 = arith.constant 0 : i32
    %c0_i32_1 = arith.constant 0 : i32
    return %c0_i32, %c0_i32_0 : i32, i32
  }
  func.func @transform_3(%arg0: i32) -> (i32, i32) {
    %c0_i32 = arith.constant 0 : i32
    %c0_i32_0 = arith.constant 0 : i32
    return %arg0, %c0_i32 : i32, i32
  }
}

module attributes {stable_mosaic.version = 11 : i64} {
  func.func @_conv_bn_add_relu_kernel(%arg0: i32, %arg1: memref<64x640xbf16, #tpu.memory_space<vmem>>, %arg2: memref<640x128xbf16, #tpu.memory_space<vmem>>, %arg3: memref<1x128xf32, #tpu.memory_space<vmem>>, %arg4: memref<64x128xbf16, #tpu.memory_space<vmem>>, %arg5: memref<64x128xbf16, #tpu.memory_space<vmem>>) attributes {dimension_semantics = [#tpu.dimension_semantics<parallel>], iteration_bounds = array<i64: 1>, scalar_prefetch = 0 : i64, scratch_operands = 0 : i64, tpu.core_type = #tpu.core_type<tc>, window_params = [{transform_indices = @transform_0, window_bounds = array<i64: 64, 640>}, {pipeline_mode = #tpu.pipeline_mode<synchronous>, transform_indices = @transform_1, window_bounds = array<i64: 640, 128>}, {pipeline_mode = #tpu.pipeline_mode<synchronous>, transform_indices = @transform_2, window_bounds = array<i64: 1, 128>}, {transform_indices = @transform_3, window_bounds = array<i64: 64, 128>}, {transform_indices = @transform_4, window_bounds = array<i64: 64, 128>}]} {
    %c0 = arith.constant 0 : index
    %c0_0 = arith.constant 0 : index
    %0 = vector.load %arg1[%c0, %c0_0] : memref<64x640xbf16, #tpu.memory_space<vmem>>, vector<64x640xbf16>
    %c0_1 = arith.constant 0 : index
    %c0_2 = arith.constant 0 : index
    %1 = vector.load %arg2[%c0_1, %c0_2] : memref<640x128xbf16, #tpu.memory_space<vmem>>, vector<640x128xbf16>
    %cst = arith.constant dense<0.000000e+00> : vector<64x128xf32>
    %2 = tpu.matmul %0, %1, %cst {dimension_numbers = #tpu.dot_dimension_numbers<[1], [0], [0], [1], [0, 0, 1, 1], [], []>} : vector<64x640xbf16>, vector<640x128xbf16>, vector<64x128xf32> -> vector<64x128xf32>
    %c0_3 = arith.constant 0 : index
    %c0_4 = arith.constant 0 : index
    %3 = vector.load %arg3[%c0_3, %c0_4] : memref<1x128xf32, #tpu.memory_space<vmem>>, vector<1x128xf32>
    %4 = vector.broadcast %3 : vector<1x128xf32> to vector<64x128xf32>
    %5 = arith.addf %2, %4 : vector<64x128xf32>
    %c0_5 = arith.constant 0 : index
    %c0_6 = arith.constant 0 : index
    %6 = vector.load %arg4[%c0_5, %c0_6] : memref<64x128xbf16, #tpu.memory_space<vmem>>, vector<64x128xbf16>
    %7 = arith.extf %6 : vector<64x128xbf16> to vector<64x128xf32>
    %8 = arith.addf %5, %7 : vector<64x128xf32>
    %cst_7 = arith.constant 0.000000e+00 : f32
    %9 = vector.broadcast %cst_7 : f32 to vector<64x128xf32>
    %10 = arith.maximumf %8, %9 : vector<64x128xf32>
    %11 = arith.truncf %10 : vector<64x128xf32> to vector<64x128xbf16>
    %c0_8 = arith.constant 0 : index
    %c0_9 = arith.constant 0 : index
    %12 = vector.load %arg5[%c0_8, %c0_9] : memref<64x128xbf16, #tpu.memory_space<vmem>>, vector<64x128xbf16>
    tpu.vector_store %arg5[%c0_8, %c0_9], %11 {strides = array<i32>} : memref<64x128xbf16, #tpu.memory_space<vmem>>, vector<64x128xbf16>,
    return
  }
  func.func @transform_0(%arg0: i32) -> (i32, i32) {
    %c0_i32 = arith.constant 0 : i32
    %c0_i32_0 = arith.constant 0 : i32
    return %arg0, %c0_i32 : i32, i32
  }
  func.func @transform_1(%arg0: i32) -> (i32, i32) {
    %c0_i32 = arith.constant 0 : i32
    %c0_i32_0 = arith.constant 0 : i32
    %c0_i32_1 = arith.constant 0 : i32
    return %c0_i32, %c0_i32_0 : i32, i32
  }
  func.func @transform_2(%arg0: i32) -> (i32, i32) {
    %c0_i32 = arith.constant 0 : i32
    %c0_i32_0 = arith.constant 0 : i32
    %c0_i32_1 = arith.constant 0 : i32
    return %c0_i32, %c0_i32_0 : i32, i32
  }
  func.func @transform_3(%arg0: i32) -> (i32, i32) {
    %c0_i32 = arith.constant 0 : i32
    %c0_i32_0 = arith.constant 0 : i32
    return %arg0, %c0_i32 : i32, i32
  }
  func.func @transform_4(%arg0: i32) -> (i32, i32) {
    %c0_i32 = arith.constant 0 : i32
    %c0_i32_0 = arith.constant 0 : i32
    return %arg0, %c0_i32 : i32, i32
  }
}

</mosaic_0001>

<llo_original>
// kernel: timm_forward_features.3
$region0: #{timm_forward_features.3}
  #allocation0 [shape = 'u32[]', space=smem, size = 0x4, offset = 0x4, fixed_abs, tag = 'smem constant byte address 0x4 - core index']
  #allocation1 [shape = 'u32[144,128]{1,0:T(1,128)}', space=vmem, size = 0x12000, scoped, tag = 'internal scratch']
  %s0 = inlined_call_operand.vmem [shape: bf16[256,128], index: 0, kind: input, shape index: {}]
  %s1 = inlined_call_operand.vmem [shape: bf16[128,128], index: 1, kind: input, shape index: {}]
  %s2 = inlined_call_operand.vmem [shape: f32[1,128], index: 2, kind: input, shape index: {}]
  %s3 = inlined_call_operand.vmem [shape: bf16[256,128], index: 3, kind: output, shape index: {}]
  %s4 = sld [smem:[#allocation0]]
  $region22: #{timm_forward_features.3} parent=0
    _
  %s6 = ssub.s32 1, %s4
  %s7 = scalar_select 0, %s6, %s4
  // Predicated region
  $region2: #{timm_forward_features.3} parent=0 // pred_check
    _
  $region3: #{timm_forward_features.3} parent=0 // pred_check_branch
    %9 = sbr.rel (0) target = $region5
  $region4: #{timm_forward_features.3} parent=0 // pred_region
    _
  $region5: #{timm_forward_features.3} parent=0 // pred_fallthru
    _
  // Predicated region
  $region6: #{timm_forward_features.3} parent=0 // pred_check
    _
  $region7: #{timm_forward_features.3} parent=0 // pred_check_branch
    %11 = sbr.rel (0) target = $region9
  $region8: #{timm_forward_features.3} parent=0 // pred_region
    _
  $region9: #{timm_forward_features.3} parent=0 // pred_fallthru
    _
  // Predicated region
  $region10: #{timm_forward_features.3} parent=0 // pred_check
    _
  $region11: #{timm_forward_features.3} parent=0 // pred_check_branch
    %13 = sbr.rel (0) target = $region13
  $region12: #{timm_forward_features.3} parent=0 // pred_region
    _
  $region13: #{timm_forward_features.3} parent=0 // pred_fallthru
    _
  %v15 = vld [vmem:[%s0] sm:$0xf]
  %v16 = vld [vmem:[%s0 + $0x4] sm:$0xf]
  %v17 = vld [vmem:[%s0 + $0x8] sm:$0xf]
  %v18 = vld [vmem:[%s0 + $0xc] sm:$0xf]
  %v19 = vld [vmem:[%s0 + $0x10] sm:$0xf]
  %v20 = vld [vmem:[%s0 + $0x14] sm:$0xf]
  %v21 = vld [vmem:[%s0 + $0x18] sm:$0xf]
  %v22 = vld [vmem:[%s0 + $0x1c] sm:$0xf]
  %v23 = vld [vmem:[%s0 + $0x20] sm:$0xf]
  %v24 = vld [vmem:[%s0 + $0x24] sm:$0xf]
  %v25 = vld [vmem:[%s0 + $0x28] sm:$0xf]
  %v26 = vld [vmem:[%s0 + $0x2c] sm:$0xf]
  %v27 = vld [vmem:[%s0 + $0x30] sm:$0xf]
  %v28 = vld [vmem:[%s0 + $0x34] sm:$0xf]
  %v29 = vld [vmem:[%s0 + $0x38] sm:$0xf]
  %v30 = vld [vmem:[%s0 + $0x3c] sm:$0xf]
  %v31 = vld [vmem:[%s0 + $0x40] sm:$0xf]
  %v32 = vld [vmem:[%s0 + $0x44] sm:$0xf]
  %v33 = vld [vmem:[%s0 + $0x48] sm:$0xf]
  %v34 = vld [vmem:[%s0 + $0x4c] sm:$0xf]
  %v35 = vld [vmem:[%s0 + $0x50] sm:$0xf]
  %v36 = vld [vmem:[%s0 + $0x54] sm:$0xf]
  %v37 = vld [vmem:[%s0 + $0x58] sm:$0xf]
  %v38 = vld [vmem:[%s0 + $0x5c] sm:$0xf]
  %v39 = vld [vmem:[%s0 + $0x60] sm:$0xf]
  %v40 = vld [vmem:[%s0 + $0x64] sm:$0xf]
  %v41 = vld [vmem:[%s0 + $0x68] sm:$0xf]
  %v42 = vld [vmem:[%s0 + $0x6c] sm:$0xf]
  %v43 = vld [vmem:[%s0 + $0x70] sm:$0xf]
  %v44 = vld [vmem:[%s0 + $0x74] sm:$0xf]
  %v45 = vld [vmem:[%s0 + $0x78] sm:$0xf]
  %v46 = vld [vmem:[%s0 + $0x7c] sm:$0xf]
  %v47 = vld [vmem:[%s1] sm:$0xf]
  %v48 = vld [vmem:[%s1 + $0x4] sm:$0xf]
  %v49 = vld [vmem:[%s1 + $0x8] sm:$0xf]
  %v50 = vld [vmem:[%s1 + $0xc] sm:$0xf]
  %v51 = vld [vmem:[%s1 + $0x10] sm:$0xf]
  %v52 = vld [vmem:[%s1 + $0x14] sm:$0xf]
  %v53 = vld [vmem:[%s1 + $0x18] sm:$0xf]
  %v54 = vld [vmem:[%s1 + $0x1c] sm:$0xf]
  %v55 = vld [vmem:[%s1 + $0x20] sm:$0xf]
  %v56 = vld [vmem:[%s1 + $0x24] sm:$0xf]
  %v57 = vld [vmem:[%s1 + $0x28] sm:$0xf]
  %v58 = vld [vmem:[%s1 + $0x2c] sm:$0xf]
  %v59 = vld [vmem:[%s1 + $0x30] sm:$0xf]
  %v60 = vld [vmem:[%s1 + $0x34] sm:$0xf]
  %v61 = vld [vmem:[%s1 + $0x38] sm:$0xf]
  %v62 = vld [vmem:[%s1 + $0x3c] sm:$0xf]
  %v63 = vld [vmem:[%s2] sm:$0x1]
  %v65 = vlaneseq
  %v66 = vshrl.u32 %v65, 7
  %v67 = vsub.s32 0, %v66
  %v68 = vrot.slane %v63, %v67
  %v102 = vunpack.c.l.b16 %v15
  %v103 = vunpack.c.l.b16 %v16
  %v104 = vunpack.c.l.b16 %v17
  %v105 = vunpack.c.l.b16 %v18
  %v106 = vunpack.c.l.b16 %v19
  %v107 = vunpack.c.l.b16 %v20
  %v108 = vunpack.c.l.b16 %v21
  %v109 = vunpack.c.l.b16 %v22
  %v110 = vunpack.c.l.b16 %v23
  %v111 = vunpack.c.l.b16 %v24
  %v112 = vunpack.c.l.b16 %v25
  %v113 = vunpack.c.l.b16 %v26
  %v114 = vunpack.c.l.b16 %v27
  %v115 = vunpack.c.l.b16 %v28
  %v116 = vunpack.c.l.b16 %v29
  %v117 = vunpack.c.l.b16 %v30
  %v118 = vunpack.c.l.b16 %v31
  %v119 = vunpack.c.l.b16 %v32
  %v120 = vunpack.c.l.b16 %v33
  %v121 = vunpack.c.l.b16 %v34
  %v122 = vunpack.c.l.b16 %v35
  %v123 = vunpack.c.l.b16 %v36
  %v124 = vunpack.c.l.b16 %v37
  %v125 = vunpack.c.l.b16 %v38
  %v126 = vunpack.c.l.b16 %v39
  %v127 = vunpack.c.l.b16 %v40
  %v128 = vunpack.c.l.b16 %v41
  %v129 = vunpack.c.l.b16 %v42
  %v130 = vunpack.c.l.b16 %v43
  %v131 = vunpack.c.l.b16 %v44
  %v132 = vunpack.c.l.b16 %v45
  %v133 = vunpack.c.l.b16 %v46
  %v134 = vpack.c.b16 %v103, %v102
  %v135 = vpack.c.b16 %v105, %v104
  %v136 = vpack.c.b16 %v107, %v106
  %v137 = vpack.c.b16 %v109, %v108
  %v138 = vpack.c.b16 %v111, %v110
  %v139 = vpack.c.b16 %v113, %v112
  %v140 = vpack.c.b16 %v115, %v114
  %v141 = vpack.c.b16 %v117, %v116
  %v142 = vpack.c.b16 %v119, %v118
  %v143 = vpack.c.b16 %v121, %v120
  %v144 = vpack.c.b16 %v123, %v122
  %v145 = vpack.c.b16 %v125, %v124
  %v146 = vpack.c.b16 %v127, %v126
  %v147 = vpack.c.b16 %v129, %v128
  %v148 = vpack.c.b16 %v131, %v130
  %v149 = vpack.c.b16 %v133, %v132
  %v182 = vunpack.c.l.b16 %v47
  %v183 = vunpack.c.l.b16 %v48
  %v184 = vunpack.c.l.b16 %v49
  %v185 = vunpack.c.l.b16 %v50
  %v186 = vunpack.c.l.b16 %v51
  %v187 = vunpack.c.l.b16 %v52
  %v188 = vunpack.c.l.b16 %v53
  %v189 = vunpack.c.l.b16 %v54
  %v190 = vunpack.c.l.b16 %v55
  %v191 = vunpack.c.l.b16 %v56
  %v192 = vunpack.c.l.b16 %v57
  %v193 = vunpack.c.l.b16 %v58
  %v194 = vunpack.c.l.b16 %v59
  %v195 = vunpack.c.l.b16 %v60
  %v196 = vunpack.c.l.b16 %v61
  %v197 = vunpack.c.l.b16 %v62
  %v198 = vpack.c.b16 %v183, %v182
  %v199 = vpack.c.b16 %v185, %v184
  %v200 = vpack.c.b16 %v187, %v186
  %v201 = vpack.c.b16 %v189, %v188
  %v202 = vpack.c.b16 %v191, %v190
  %v203 = vpack.c.b16 %v193, %v192
  %v204 = vpack.c.b16 %v195, %v194
  %v205 = vpack.c.b16 %v197, %v196
  %214 = vmatprep.subr.bf16.mxu0 0
  %215 = vmatpush1.bf16.msra.mxu0 %v198
  %216 = vmatprep.subr.bf16.mxu0 0
  %217 = vmatpush1.bf16.msra.mxu0 %v199
  %218 = vmatprep.subr.bf16.mxu0 0
  %219 = vmatpush1.bf16.msra.mxu0 %v200
  %220 = vmatprep.subr.bf16.mxu0 0
  %221 = vmatpush1.bf16.msra.mxu0 %v201
  %222 = vmatprep.subr.bf16.mxu0 0
  %223 = vmatpush1.bf16.msra.mxu0 %v202
  %224 = vmatprep.subr.bf16.mxu0 0
  %225 = vmatpush1.bf16.msra.mxu0 %v203
  %226 = vmatprep.subr.bf16.mxu0 0
  %227 = vmatpush1.bf16.msra.mxu0 %v204
  %228 = vmatprep.subr.bf16.mxu0 0
  %229 = vmatpush1.bf16.msra.mxu0 %v205
  %230 = vmatprep.subr.bf16.mxu0 0
  %231 = vmatpush1.bf16.msra.mxu0 0
  %232 = vmatprep.subr.bf16.mxu0 0
  %233 = vmatpush1.bf16.msra.mxu0 0
  %234 = vmatprep.subr.bf16.mxu0 0
  %235 = vmatpush1.bf16.msra.mxu0 0
  %236 = vmatprep.subr.bf16.mxu0 0
  %237 = vmatpush1.bf16.msra.mxu0 0
  %238 = vmatprep.subr.bf16.mxu0 0
  %239 = vmatpush1.bf16.msra.mxu0 0
  %240 = vmatprep.subr.bf16.mxu0 0
  %241 = vmatpush1.bf16.msra.mxu0 0
  %242 = vmatprep.subr.bf16.mxu0 0
  %243 = vmatpush1.bf16.msra.mxu0 0
  %244 = vmatprep.subr.bf16.mxu0 0
  %245 = vmatpush1.bf16.msra.mxu0 0
  %246 = vmatprep.mubr.bf16.mxu0 0
  %247 = vmatmul.mubr.bf16.gmra.mrb[0].mxu0 %v134
  %v248 = vpop.f32.mrb[0].mxu0
  %v249 = vadd.f32 %v68, %v248
  %v250 = vpop.f32.mrb[0].mxu0
  %v251 = vpop.f32.mrb[0].mxu0
  %v252 = vadd.f32 %v68, %v251
  %v253 = vpop.f32.mrb[0].mxu0
  %254 = vmatprep.mubr.bf16.mxu0 0
  %255 = vmatmul.mubr.bf16.gmra.mrb[0].mxu0 %v135
  %v256 = vpop.f32.mrb[0].mxu0
  %v257 = vadd.f32 %v68, %v256
  %v258 = vpop.f32.mrb[0].mxu0
  %v259 = vpop.f32.mrb[0].mxu0
  %v260 = vadd.f32 %v68, %v259
  %v261 = vpop.f32.mrb[0].mxu0
  %262 = vmatprep.mubr.bf16.mxu0 0
  %263 = vmatmul.mubr.bf16.gmra.mrb[0].mxu0 %v136
  %v264 = vpop.f32.mrb[0].mxu0
  %v265 = vadd.f32 %v68, %v264
  %v266 = vpop.f32.mrb[0].mxu0
  %v267 = vpop.f32.mrb[0].mxu0
  %v268 = vadd.f32 %v68, %v267
  %v269 = vpop.f32.mrb[0].mxu0
  %270 = vmatprep.mubr.bf16.mxu0 0
  %271 = vmatmul.mubr.bf16.gmra.mrb[0].mxu0 %v137
  %v272 = vpop.f32.mrb[0].mxu0
  %v273 = vadd.f32 %v68, %v272
  %v274 = vpop.f32.mrb[0].mxu0
  %v275 = vpop.f32.mrb[0].mxu0
  %v276 = vadd.f32 %v68, %v275
  %v277 = vpop.f32.mrb[0].mxu0
  %278 = vmatprep.mubr.bf16.mxu0 0
  %279 = vmatmul.mubr.bf16.gmra.mrb[0].mxu0 %v138
  %v280 = vpop.f32.mrb[0].mxu0
  %v281 = vadd.f32 %v68, %v280
  %v282 = vpop.f32.mrb[0].mxu0
  %v283 = vpop.f32.mrb[0].mxu0
  %v284 = vadd.f32 %v68, %v283
  %v285 = vpop.f32.mrb[0].mxu0
  %286 = vmatprep.mubr.bf16.mxu0 0
  %287 = vmatmul.mubr.bf16.gmra.mrb[0].mxu0 %v139
  %v288 = vpop.f32.mrb[0].mxu0
  %v289 = vadd.f32 %v68, %v288
  %v290 = vpop.f32.mrb[0].mxu0
  %v291 = vpop.f32.mrb[0].mxu0
  %v292 = vadd.f32 %v68, %v291
  %v293 = vpop.f32.mrb[0].mxu0
  %294 = vmatprep.mubr.bf16.mxu0 0
  %295 = vmatmul.mubr.bf16.gmra.mrb[0].mxu0 %v140
  %v296 = vpop.f32.mrb[0].mxu0
  %v297 = vadd.f32 %v68, %v296
  %v298 = vpop.f32.mrb[0].mxu0
  %v299 = vpop.f32.mrb[0].mxu0
  %v300 = vadd.f32 %v68, %v299
  %v301 = vpop.f32.mrb[0].mxu0
  %302 = vmatprep.mubr.bf16.mxu0 0
  %303 = vmatmul.mubr.bf16.gmra.mrb[0].mxu0 %v141
  %v304 = vpop.f32.mrb[0].mxu0
  %v305 = vadd.f32 %v68, %v304
  %v306 = vpop.f32.mrb[0].mxu0
  %v307 = vpop.f32.mrb[0].mxu0
  %v308 = vadd.f32 %v68, %v307
  %v309 = vpop.f32.mrb[0].mxu0
  %310 = vmatprep.mubr.bf16.mxu0 0
  %311 = vmatmul.mubr.bf16.gmra.mrb[0].mxu0 %v142
  %v312 = vpop.f32.mrb[0].mxu0
  %v313 = vadd.f32 %v68, %v312
  %v314 = vpop.f32.mrb[0].mxu0
  %v315 = vpop.f32.mrb[0].mxu0
  %v316 = vadd.f32 %v68, %v315
  %v317 = vpop.f32.mrb[0].mxu0
  %318 = vmatprep.mubr.bf16.mxu0 0
  %319 = vmatmul.mubr.bf16.gmra.mrb[0].mxu0 %v143
  %v320 = vpop.f32.mrb[0].mxu0
  %v321 = vadd.f32 %v68, %v320
  %v322 = vpop.f32.mrb[0].mxu0
  %v323 = vpop.f32.mrb[0].mxu0
  %v324 = vadd.f32 %v68, %v323
  %v325 = vpop.f32.mrb[0].mxu0
  %326 = vmatprep.mubr.bf16.mxu0 0
  %327 = vmatmul.mubr.bf16.gmra.mrb[0].mxu0 %v144
  %v328 = vpop.f32.mrb[0].mxu0
  %v329 = vadd.f32 %v68, %v328
  %v330 = vpop.f32.mrb[0].mxu0
  %v331 = vpop.f32.mrb[0].mxu0
  %v332 = vadd.f32 %v68, %v331
  %v333 = vpop.f32.mrb[0].mxu0
  %334 = vmatprep.mubr.bf16.mxu0 0
  %335 = vmatmul.mubr.bf16.gmra.mrb[0].mxu0 %v145
  %v336 = vpop.f32.mrb[0].mxu0
  %v337 = vadd.f32 %v68, %v336
  %v338 = vpop.f32.mrb[0].mxu0
  %v339 = vpop.f32.mrb[0].mxu0
  %v340 = vadd.f32 %v68, %v339
  %v341 = vpop.f32.mrb[0].mxu0
  %342 = vmatprep.mubr.bf16.mxu0 0
  %343 = vmatmul.mubr.bf16.gmra.mrb[0].mxu0 %v146
  %v344 = vpop.f32.mrb[0].mxu0
  %v345 = vadd.f32 %v68, %v344
  %v346 = vpop.f32.mrb[0].mxu0
  %v347 = vpop.f32.mrb[0].mxu0
  %v348 = vadd.f32 %v68, %v347
  %v349 = vpop.f32.mrb[0].mxu0
  %350 = vmatprep.mubr.bf16.mxu0 0
  %351 = vmatmul.mubr.bf16.gmra.mrb[0].mxu0 %v147
  %v352 = vpop.f32.mrb[0].mxu0
  %v353 = vadd.f32 %v68, %v352
  %v354 = vpop.f32.mrb[0].mxu0
  %v355 = vpop.f32.mrb[0].mxu0
  %v356 = vadd.f32 %v68, %v355
  %v357 = vpop.f32.mrb[0].mxu0
  %358 = vmatprep.mubr.bf16.mxu0 0
  %359 = vmatmul.mubr.bf16.gmra.mrb[0].mxu0 %v148
  %v360 = vpop.f32.mrb[0].mxu0
  %v361 = vadd.f32 %v68, %v360
  %v362 = vpop.f32.mrb[0].mxu0
  %v363 = vpop.f32.mrb[0].mxu0
  %v364 = vadd.f32 %v68, %v363
  %v365 = vpop.f32.mrb[0].mxu0
  %366 = vmatprep.mubr.bf16.mxu0 0
  %367 = vmatmul.mubr.bf16.gmra.mrb[0].mxu0 %v149
  %v368 = vpop.f32.mrb[0].mxu0
  %v369 = vadd.f32 %v68, %v368
  %v370 = vpop.f32.mrb[0].mxu0
  %v371 = vpop.f32.mrb[0].mxu0
  %v372 = vadd.f32 %v68, %v371
  %v373 = vpop.f32.mrb[0].mxu0
  %374 = vdwg.mxu0
  %v375 = vmax.f32 %v249, 0.0
  %v376 = vmax.f32 %v252, 0.0
  %v377 = vmax.f32 %v257, 0.0
  %v378 = vmax.f32 %v260, 0.0
  %v379 = vmax.f32 %v265, 0.0
  %v380 = vmax.f32 %v268, 0.0
  %v381 = vmax.f32 %v273, 0.0
  %v382 = vmax.f32 %v276, 0.0
  %v383 = vmax.f32 %v281, 0.0
  %v384 = vmax.f32 %v284, 0.0
  %v385 = vmax.f32 %v289, 0.0
  %v386 = vmax.f32 %v292, 0.0
  %v387 = vmax.f32 %v297, 0.0
  %v388 = vmax.f32 %v300, 0.0
  %v389 = vmax.f32 %v305, 0.0
  %v390 = vmax.f32 %v308, 0.0
  %v391 = vmax.f32 %v313, 0.0
  %v392 = vmax.f32 %v316, 0.0
  %v393 = vmax.f32 %v321, 0.0
  %v394 = vmax.f32 %v324, 0.0
  %v395 = vmax.f32 %v329, 0.0
  %v396 = vmax.f32 %v332, 0.0
  %v397 = vmax.f32 %v337, 0.0
  %v398 = vmax.f32 %v340, 0.0
  %v399 = vmax.f32 %v345, 0.0
  %v400 = vmax.f32 %v348, 0.0
  %v401 = vmax.f32 %v353, 0.0
  %v402 = vmax.f32 %v356, 0.0
  %v403 = vmax.f32 %v361, 0.0
  %v404 = vmax.f32 %v364, 0.0
  %v405 = vmax.f32 %v369, 0.0
  %v406 = vmax.f32 %v372, 0.0
  %v407 = vpack.c.bf16 %v376, %v375
  %v408 = vpack.c.bf16 %v378, %v377
  %v409 = vpack.c.bf16 %v380, %v379
  %v410 = vpack.c.bf16 %v382, %v381
  %v411 = vpack.c.bf16 %v384, %v383
  %v412 = vpack.c.bf16 %v386, %v385
  %v413 = vpack.c.bf16 %v388, %v387
  %v414 = vpack.c.bf16 %v390, %v389
  %v415 = vpack.c.bf16 %v392, %v391
  %v416 = vpack.c.bf16 %v394, %v393
  %v417 = vpack.c.bf16 %v396, %v395
  %v418 = vpack.c.bf16 %v398, %v397
  %v419 = vpack.c.bf16 %v400, %v399
  %v420 = vpack.c.bf16 %v402, %v401
  %v421 = vpack.c.bf16 %v404, %v403
  %v422 = vpack.c.bf16 %v406, %v405
  %v439 = vunpack.c.l.b16 %v407
  %v440 = vunpack.c.h.b16 %v407
  %v441 = vunpack.c.l.b16 %v408
  %v442 = vunpack.c.h.b16 %v408
  %v443 = vunpack.c.l.b16 %v409
  %v444 = vunpack.c.h.b16 %v409
  %v445 = vunpack.c.l.b16 %v410
  %v446 = vunpack.c.h.b16 %v410
  %v447 = vunpack.c.l.b16 %v411
  %v448 = vunpack.c.h.b16 %v411
  %v449 = vunpack.c.l.b16 %v412
  %v450 = vunpack.c.h.b16 %v412
  %v451 = vunpack.c.l.b16 %v413
  %v452 = vunpack.c.h.b16 %v413
  %v453 = vunpack.c.l.b16 %v414
  %v454 = vunpack.c.h.b16 %v414
  %v455 = vunpack.c.l.b16 %v415
  %v456 = vunpack.c.h.b16 %v415
  %v457 = vunpack.c.l.b16 %v416
  %v458 = vunpack.c.h.b16 %v416
  %v459 = vunpack.c.l.b16 %v417
  %v460 = vunpack.c.h.b16 %v417
  %v461 = vunpack.c.l.b16 %v418
  %v462 = vunpack.c.h.b16 %v418
  %v463 = vunpack.c.l.b16 %v419
  %v464 = vunpack.c.h.b16 %v419
  %v465 = vunpack.c.l.b16 %v420
  %v466 = vunpack.c.h.b16 %v420
  %v467 = vunpack.c.l.b16 %v421
  %v468 = vunpack.c.h.b16 %v421
  %v469 = vunpack.c.l.b16 %v422
  %v470 = vunpack.c.h.b16 %v422
  %v471 = vpack.c.b16 %v439, %v439
  %v472 = vpack.c.b16 %v440, %v440
  %v473 = vpack.c.b16 %v441, %v441
  %v474 = vpack.c.b16 %v442, %v442
  %v475 = vpack.c.b16 %v443, %v443
  %v476 = vpack.c.b16 %v444, %v444
  %v477 = vpack.c.b16 %v445, %v445
  %v478 = vpack.c.b16 %v446, %v446
  %v479 = vpack.c.b16 %v447, %v447
  %v480 = vpack.c.b16 %v448, %v448
  %v481 = vpack.c.b16 %v449, %v449
  %v482 = vpack.c.b16 %v450, %v450
  %v483 = vpack.c.b16 %v451, %v451
  %v484 = vpack.c.b16 %v452, %v452
  %v485 = vpack.c.b16 %v453, %v453
  %v486 = vpack.c.b16 %v454, %v454
  %v487 = vpack.c.b16 %v455, %v455
  %v488 = vpack.c.b16 %v456, %v456
  %v489 = vpack.c.b16 %v457, %v457
  %v490 = vpack.c.b16 %v458, %v458
  %v491 = vpack.c.b16 %v459, %v459
  %v492 = vpack.c.b16 %v460, %v460
  %v493 = vpack.c.b16 %v461, %v461
  %v494 = vpack.c.b16 %v462, %v462
  %v495 = vpack.c.b16 %v463, %v463
  %v496 = vpack.c.b16 %v464, %v464
  %v497 = vpack.c.b16 %v465, %v465
  %v498 = vpack.c.b16 %v466, %v466
  %v499 = vpack.c.b16 %v467, %v467
  %v500 = vpack.c.b16 %v468, %v468
  %v501 = vpack.c.b16 %v469, %v469
  %v502 = vpack.c.b16 %v470, %v470
  %535 = vst [vmem:[%s3] sm:$0xf] %v471
  %536 = vst [vmem:[%s3 + $0x4] sm:$0xf] %v472
  %537 = vst [vmem:[%s3 + $0x8] sm:$0xf] %v473
  %538 = vst [vmem:[%s3 + $0xc] sm:$0xf] %v474
  %539 = vst [vmem:[%s3 + $0x10] sm:$0xf] %v475
  %540 = vst [vmem:[%s3 + $0x14] sm:$0xf] %v476
  %541 = vst [vmem:[%s3 + $0x18] sm:$0xf] %v477
  %542 = vst [vmem:[%s3 + $0x1c] sm:$0xf] %v478
  %543 = vst [vmem:[%s3 + $0x20] sm:$0xf] %v479
  %544 = vst [vmem:[%s3 + $0x24] sm:$0xf] %v480
  %545 = vst [vmem:[%s3 + $0x28] sm:$0xf] %v481
  %546 = vst [vmem:[%s3 + $0x2c] sm:$0xf] %v482
  %547 = vst [vmem:[%s3 + $0x30] sm:$0xf] %v483
  %548 = vst [vmem:[%s3 + $0x34] sm:$0xf] %v484
  %549 = vst [vmem:[%s3 + $0x38] sm:$0xf] %v485
  %550 = vst [vmem:[%s3 + $0x3c] sm:$0xf] %v486
  %551 = vst [vmem:[%s3 + $0x40] sm:$0xf] %v487
  %552 = vst [vmem:[%s3 + $0x44] sm:$0xf] %v488
  %553 = vst [vmem:[%s3 + $0x48] sm:$0xf] %v489
  %554 = vst [vmem:[%s3 + $0x4c] sm:$0xf] %v490
  %555 = vst [vmem:[%s3 + $0x50] sm:$0xf] %v491
  %556 = vst [vmem:[%s3 + $0x54] sm:$0xf] %v492
  %557 = vst [vmem:[%s3 + $0x58] sm:$0xf] %v493
  %558 = vst [vmem:[%s3 + $0x5c] sm:$0xf] %v494
  %559 = vst [vmem:[%s3 + $0x60] sm:$0xf] %v495
  %560 = vst [vmem:[%s3 + $0x64] sm:$0xf] %v496
  %561 = vst [vmem:[%s3 + $0x68] sm:$0xf] %v497
  %562 = vst [vmem:[%s3 + $0x6c] sm:$0xf] %v498
  %563 = vst [vmem:[%s3 + $0x70] sm:$0xf] %v499
  %564 = vst [vmem:[%s3 + $0x74] sm:$0xf] %v500
  %565 = vst [vmem:[%s3 + $0x78] sm:$0xf] %v501
  %566 = vst [vmem:[%s3 + $0x7c] sm:$0xf] %v502
  // Predicated region
  $region14: #{timm_forward_features.3} parent=0 // pred_check
    _
  $region15: #{timm_forward_features.3} parent=0 // pred_check_branch
    %568 = sbr.rel (0) target = $region17
  $region16: #{timm_forward_features.3} parent=0 // pred_region
    _
  $region17: #{timm_forward_features.3} parent=0 // pred_fallthru
    _
  // Predicated region
  $region18: #{timm_forward_features.3} parent=0 // pred_check
    _
  $region19: #{timm_forward_features.3} parent=0 // pred_check_branch
    %570 = sbr.rel (0) target = $region21
  $region20: #{timm_forward_features.3} parent=0 // pred_region
    _
  $region21: #{timm_forward_features.3} parent=0 // pred_fallthru
    _

// kernel: timm_forward_features.4
$region0: #{timm_forward_features.4}
  #allocation0 [shape = 'u32[]', space=smem, size = 0x4, offset = 0x4, fixed_abs, tag = 'smem constant byte address 0x4 - core index']
  #allocation1 [shape = 'u32[144,128]{1,0:T(1,128)}', space=vmem, size = 0x12000, scoped, tag = 'internal scratch']
  %s0 = inlined_call_operand.vmem [shape: bf16[64,384], index: 0, kind: input, shape index: {}]
  %s1 = inlined_call_operand.vmem [shape: bf16[384,128], index: 1, kind: input, shape index: {}]
  %s2 = inlined_call_operand.vmem [shape: f32[1,128], index: 2, kind: input, shape index: {}]
  %s3 = inlined_call_operand.vmem [shape: bf16[64,128], index: 3, kind: output, shape index: {}]
  %s4 = sld [smem:[#allocation0]]
  $region22: #{timm_forward_features.4} parent=0
    _
  %s6 = ssub.s32 1, %s4
  %s7 = scalar_select 0, %s6, %s4
  // Predicated region
  $region2: #{timm_forward_features.4} parent=0 // pred_check
    _
  $region3: #{timm_forward_features.4} parent=0 // pred_check_branch
    %9 = sbr.rel (0) target = $region5
  $region4: #{timm_forward_features.4} parent=0 // pred_region
    _
  $region5: #{timm_forward_features.4} parent=0 // pred_fallthru
    _
  // Predicated region
  $region6: #{timm_forward_features.4} parent=0 // pred_check
    _
  $region7: #{timm_forward_features.4} parent=0 // pred_check_branch
    %11 = sbr.rel (0) target = $region9
  $region8: #{timm_forward_features.4} parent=0 // pred_region
    _
  $region9: #{timm_forward_features.4} parent=0 // pred_fallthru
    _
  // Predicated region
  $region10: #{timm_forward_features.4} parent=0 // pred_check
    _
  $region11: #{timm_forward_features.4} parent=0 // pred_check_branch
    %13 = sbr.rel (0) target = $region13
  $region12: #{timm_forward_features.4} parent=0 // pred_region
    _
  $region13: #{timm_forward_features.4} parent=0 // pred_fallthru
    _
  %v15 = vld [vmem:[%s0] sm:$0xff]
  %v16 = vld [vmem:[%s0 + $0x8] sm:$0xf]
  %v17 = vld [vmem:[%s0 + $0xc] sm:$0xff]
  %v18 = vld [vmem:[%s0 + $0x14] sm:$0xf]
  %v19 = vld [vmem:[%s0 + $0x18] sm:$0xff]
  %v20 = vld [vmem:[%s0 + $0x20] sm:$0xf]
  %v21 = vld [vmem:[%s0 + $0x24] sm:$0xff]
  %v22 = vld [vmem:[%s0 + $0x2c] sm:$0xf]
  %v23 = vld [vmem:[%s0 + $0x30] sm:$0xff]
  %v24 = vld [vmem:[%s0 + $0x38] sm:$0xf]
  %v25 = vld [vmem:[%s0 + $0x3c] sm:$0xff]
  %v26 = vld [vmem:[%s0 + $0x44] sm:$0xf]
  %v27 = vld [vmem:[%s0 + $0x48] sm:$0xff]
  %v28 = vld [vmem:[%s0 + $0x50] sm:$0xf]
  %v29 = vld [vmem:[%s0 + $0x54] sm:$0xff]
  %v30 = vld [vmem:[%s0 + $0x5c] sm:$0xf]
  %v31 = vld [vmem:[%s1] sm:$0xf]
  %v32 = vld [vmem:[%s1 + $0x4] sm:$0xf]
  %v33 = vld [vmem:[%s1 + $0x8] sm:$0xf]
  %v34 = vld [vmem:[%s1 + $0xc] sm:$0xf]
  %v35 = vld [vmem:[%s1 + $0x10] sm:$0xf]
  %v36 = vld [vmem:[%s1 + $0x14] sm:$0xf]
  %v37 = vld [vmem:[%s1 + $0x18] sm:$0xf]
  %v38 = vld [vmem:[%s1 + $0x1c] sm:$0xf]
  %v39 = vld [vmem:[%s1 + $0x20] sm:$0xf]
  %v40 = vld [vmem:[%s1 + $0x24] sm:$0xf]
  %v41 = vld [vmem:[%s1 + $0x28] sm:$0xf]
  %v42 = vld [vmem:[%s1 + $0x2c] sm:$0xf]
  %v43 = vld [vmem:[%s1 + $0x30] sm:$0xf]
  %v44 = vld [vmem:[%s1 + $0x34] sm:$0xf]
  %v45 = vld [vmem:[%s1 + $0x38] sm:$0xf]
  %v46 = vld [vmem:[%s1 + $0x3c] sm:$0xf]
  %v47 = vld [vmem:[%s1 + $0x40] sm:$0xf]
  %v48 = vld [vmem:[%s1 + $0x44] sm:$0xf]
  %v49 = vld [vmem:[%s1 + $0x48] sm:$0xf]
  %v50 = vld [vmem:[%s1 + $0x4c] sm:$0xf]
  %v51 = vld [vmem:[%s1 + $0x50] sm:$0xf]
  %v52 = vld [vmem:[%s1 + $0x54] sm:$0xf]
  %v53 = vld [vmem:[%s1 + $0x58] sm:$0xf]
  %v54 = vld [vmem:[%s1 + $0x5c] sm:$0xf]
  %v55 = vld [vmem:[%s1 + $0x60] sm:$0xf]
  %v56 = vld [vmem:[%s1 + $0x64] sm:$0xf]
  %v57 = vld [vmem:[%s1 + $0x68] sm:$0xf]
  %v58 = vld [vmem:[%s1 + $0x6c] sm:$0xf]
  %v59 = vld [vmem:[%s1 + $0x70] sm:$0xf]
  %v60 = vld [vmem:[%s1 + $0x74] sm:$0xf]
  %v61 = vld [vmem:[%s1 + $0x78] sm:$0xf]
  %v62 = vld [vmem:[%s1 + $0x7c] sm:$0xf]
  %v63 = vld [vmem:[%s1 + $0x80] sm:$0xf]
  %v64 = vld [vmem:[%s1 + $0x84] sm:$0xf]
  %v65 = vld [vmem:[%s1 + $0x88] sm:$0xf]
  %v66 = vld [vmem:[%s1 + $0x8c] sm:$0xf]
  %v67 = vld [vmem:[%s1 + $0x90] sm:$0xf]
  %v68 = vld [vmem:[%s1 + $0x94] sm:$0xf]
  %v69 = vld [vmem:[%s1 + $0x98] sm:$0xf]
  %v70 = vld [vmem:[%s1 + $0x9c] sm:$0xf]
  %v71 = vld [vmem:[%s1 + $0xa0] sm:$0xf]
  %v72 = vld [vmem:[%s1 + $0xa4] sm:$0xf]
  %v73 = vld [vmem:[%s1 + $0xa8] sm:$0xf]
  %v74 = vld [vmem:[%s1 + $0xac] sm:$0xf]
  %v75 = vld [vmem:[%s1 + $0xb0] sm:$0xf]
  %v76 = vld [vmem:[%s1 + $0xb4] sm:$0xf]
  %v77 = vld [vmem:[%s1 + $0xb8] sm:$0xf]
  %v78 = vld [vmem:[%s1 + $0xbc] sm:$0xf]
  %v79 = vld [vmem:[%s2] sm:$0x1]
  %v81 = vlaneseq
  %v82 = vshrl.u32 %v81, 7
  %v83 = vsub.s32 0, %v82
  %v84 = vrot.slane %v79, %v83
  %v102 = vunpack.c.l.b16 %v15
  %v103 = vunpack.c.h.b16 %v15
  %v104 = vunpack.c.l.b16 %v16
  %v105 = vunpack.c.l.b16 %v17
  %v106 = vunpack.c.h.b16 %v17
  %v107 = vunpack.c.l.b16 %v18
  %v108 = vunpack.c.l.b16 %v19
  %v109 = vunpack.c.h.b16 %v19
  %v110 = vunpack.c.l.b16 %v20
  %v111 = vunpack.c.l.b16 %v21
  %v112 = vunpack.c.h.b16 %v21
  %v113 = vunpack.c.l.b16 %v22
  %v114 = vunpack.c.l.b16 %v23
  %v115 = vunpack.c.h.b16 %v23
  %v116 = vunpack.c.l.b16 %v24
  %v117 = vunpack.c.l.b16 %v25
  %v118 = vunpack.c.h.b16 %v25
  %v119 = vunpack.c.l.b16 %v26
  %v120 = vunpack.c.l.b16 %v27
  %v121 = vunpack.c.h.b16 %v27
  %v122 = vunpack.c.l.b16 %v28
  %v123 = vunpack.c.l.b16 %v29
  %v124 = vunpack.c.h.b16 %v29
  %v125 = vunpack.c.l.b16 %v30
  %v126 = vpack.c.b16 %v105, %v102
  %v127 = vpack.c.b16 %v106, %v103
  %v128 = vpack.c.b16 %v107, %v104
  %v129 = vpack.c.b16 %v111, %v108
  %v130 = vpack.c.b16 %v112, %v109
  %v131 = vpack.c.b16 %v113, %v110
  %v132 = vpack.c.b16 %v117, %v114
  %v133 = vpack.c.b16 %v118, %v115
  %v134 = vpack.c.b16 %v119, %v116
  %v135 = vpack.c.b16 %v123, %v120
  %v136 = vpack.c.b16 %v124, %v121
  %v137 = vpack.c.b16 %v125, %v122
  %v198 = vunpack.c.l.b16 %v31
  %v199 = vunpack.c.l.b16 %v32
  %v200 = vunpack.c.l.b16 %v33
  %v201 = vunpack.c.l.b16 %v34
  %v202 = vunpack.c.l.b16 %v35
  %v203 = vunpack.c.l.b16 %v36
  %v204 = vunpack.c.l.b16 %v37
  %v205 = vunpack.c.l.b16 %v38
  %v206 = vunpack.c.l.b16 %v39
  %v207 = vunpack.c.l.b16 %v40
  %v208 = vunpack.c.l.b16 %v41
  %v209 = vunpack.c.l.b16 %v42
  %v210 = vunpack.c.l.b16 %v43
  %v211 = vunpack.c.l.b16 %v44
  %v212 = vunpack.c.l.b16 %v45
  %v213 = vunpack.c.l.b16 %v46
  %v214 = vunpack.c.l.b16 %v47
  %v215 = vunpack.c.l.b16 %v48
  %v216 = vunpack.c.l.b16 %v49
  %v217 = vunpack.c.l.b16 %v50
  %v218 = vunpack.c.l.b16 %v51
  %v219 = vunpack.c.l.b16 %v52
  %v220 = vunpack.c.l.b16 %v53
  %v221 = vunpack.c.l.b16 %v54
  %v222 = vunpack.c.l.b16 %v55
  %v223 = vunpack.c.l.b16 %v56
  %v224 = vunpack.c.l.b16 %v57
  %v225 = vunpack.c.l.b16 %v58
  %v226 = vunpack.c.l.b16 %v59
  %v227 = vunpack.c.l.b16 %v60
  %v228 = vunpack.c.l.b16 %v61
  %v229 = vunpack.c.l.b16 %v62
  %v230 = vunpack.c.l.b16 %v63
  %v231 = vunpack.c.l.b16 %v64
  %v232 = vunpack.c.l.b16 %v65
  %v233 = vunpack.c.l.b16 %v66
  %v234 = vunpack.c.l.b16 %v67
  %v235 = vunpack.c.l.b16 %v68
  %v236 = vunpack.c.l.b16 %v69
  %v237 = vunpack.c.l.b16 %v70
  %v238 = vunpack.c.l.b16 %v71
  %v239 = vunpack.c.l.b16 %v72
  %v240 = vunpack.c.l.b16 %v73
  %v241 = vunpack.c.l.b16 %v74
  %v242 = vunpack.c.l.b16 %v75
  %v243 = vunpack.c.l.b16 %v76
  %v244 = vunpack.c.l.b16 %v77
  %v245 = vunpack.c.l.b16 %v78
  %v246 = vpack.c.b16 %v199, %v198
  %v247 = vpack.c.b16 %v201, %v200
  %v248 = vpack.c.b16 %v203, %v202
  %v249 = vpack.c.b16 %v205, %v204
  %v250 = vpack.c.b16 %v207, %v206
  %v251 = vpack.c.b16 %v209, %v208
  %v252 = vpack.c.b16 %v211, %v210
  %v253 = vpack.c.b16 %v213, %v212
  %v254 = vpack.c.b16 %v215, %v214
  %v255 = vpack.c.b16 %v217, %v216
  %v256 = vpack.c.b16 %v219, %v218
  %v257 = vpack.c.b16 %v221, %v220
  %v258 = vpack.c.b16 %v223, %v222
  %v259 = vpack.c.b16 %v225, %v224
  %v260 = vpack.c.b16 %v227, %v226
  %v261 = vpack.c.b16 %v229, %v228
  %v262 = vpack.c.b16 %v231, %v230
  %v263 = vpack.c.b16 %v233, %v232
  %v264 = vpack.c.b16 %v235, %v234
  %v265 = vpack.c.b16 %v237, %v236
  %v266 = vpack.c.b16 %v239, %v238
  %v267 = vpack.c.b16 %v241, %v240
  %v268 = vpack.c.b16 %v243, %v242
  %v269 = vpack.c.b16 %v245, %v244
  %294 = vmatprep.subr.bf16.mxu0 0
  %295 = vmatpush1.bf16.msra.mxu0 %v246
  %296 = vmatprep.subr.bf16.mxu0 0
  %297 = vmatpush1.bf16.msra.mxu0 %v247
  %298 = vmatprep.subr.bf16.mxu0 0
  %299 = vmatpush1.bf16.msra.mxu0 %v248
  %300 = vmatprep.subr.bf16.mxu0 0
  %301 = vmatpush1.bf16.msra.mxu0 %v249
  %302 = vmatprep.subr.bf16.mxu0 0
  %303 = vmatpush1.bf16.msra.mxu0 %v250
  %304 = vmatprep.subr.bf16.mxu0 0
  %305 = vmatpush1.bf16.msra.mxu0 %v251
  %306 = vmatprep.subr.bf16.mxu0 0
  %307 = vmatpush1.bf16.msra.mxu0 %v252
  %308 = vmatprep.subr.bf16.mxu0 0
  %309 = vmatpush1.bf16.msra.mxu0 %v253
  %310 = vmatprep.subr.bf16.mxu0 0
  %311 = vmatpush1.bf16.msra.mxu0 %v254
  %312 = vmatprep.subr.bf16.mxu0 0
  %313 = vmatpush1.bf16.msra.mxu0 %v255
  %314 = vmatprep.subr.bf16.mxu0 0
  %315 = vmatpush1.bf16.msra.mxu0 %v256
  %316 = vmatprep.subr.bf16.mxu0 0
  %317 = vmatpush1.bf16.msra.mxu0 %v257
  %318 = vmatprep.subr.bf16.mxu0 0
  %319 = vmatpush1.bf16.msra.mxu0 %v258
  %320 = vmatprep.subr.bf16.mxu0 0
  %321 = vmatpush1.bf16.msra.mxu0 %v259
  %322 = vmatprep.subr.bf16.mxu0 0
  %323 = vmatpush1.bf16.msra.mxu0 %v260
  %324 = vmatprep.subr.bf16.mxu0 0
  %325 = vmatpush1.bf16.msra.mxu0 %v261
  %326 = vmatprep.mubr.bf16.mxu0 %v127
  %327 = vmatmul.mubr.bf16.gmra.mrb[0].mxu0 %v126
  %v328 = vpop.f32.mrb[0].mxu0
  %v329 = vadd.f32 %v84, %v328
  %v330 = vpop.f32.mrb[0].mxu0
  %v331 = vpop.f32.mrb[0].mxu0
  %v332 = vadd.f32 %v84, %v331
  %v333 = vpop.f32.mrb[0].mxu0
  %334 = vmatprep.mubr.bf16.mxu0 %v130
  %335 = vmatmul.mubr.bf16.gmra.mrb[0].mxu0 %v129
  %v336 = vpop.f32.mrb[0].mxu0
  %v337 = vadd.f32 %v84, %v336
  %v338 = vpop.f32.mrb[0].mxu0
  %v339 = vpop.f32.mrb[0].mxu0
  %v340 = vadd.f32 %v84, %v339
  %v341 = vpop.f32.mrb[0].mxu0
  %342 = vmatprep.mubr.bf16.mxu0 %v133
  %343 = vmatmul.mubr.bf16.gmra.mrb[0].mxu0 %v132
  %v344 = vpop.f32.mrb[0].mxu0
  %v345 = vadd.f32 %v84, %v344
  %v346 = vpop.f32.mrb[0].mxu0
  %v347 = vpop.f32.mrb[0].mxu0
  %v348 = vadd.f32 %v84, %v347
  %v349 = vpop.f32.mrb[0].mxu0
  %350 = vmatprep.mubr.bf16.mxu0 %v136
  %351 = vmatmul.mubr.bf16.gmra.mrb[0].mxu0 %v135
  %v352 = vpop.f32.mrb[0].mxu0
  %v353 = vadd.f32 %v84, %v352
  %v354 = vpop.f32.mrb[0].mxu0
  %v355 = vpop.f32.mrb[0].mxu0
  %v356 = vadd.f32 %v84, %v355
  %v357 = vpop.f32.mrb[0].mxu0
  %358 = vdwg.mxu0
  %359 = vmatprep.subr.bf16.mxu0 0
  %360 = vmatpush1.bf16.msra.mxu0 %v262
  %361 = vmatprep.subr.bf16.mxu0 0
  %362 = vmatpush1.bf16.msra.mxu0 %v263
  %363 = vmatprep.subr.bf16.mxu0 0
  %364 = vmatpush1.bf16.msra.mxu0 %v264
  %365 = vmatprep.subr.bf16.mxu0 0
  %366 = vmatpush1.bf16.msra.mxu0 %v265
  %367 = vmatprep.subr.bf16.mxu0 0
  %368 = vmatpush1.bf16.msra.mxu0 %v266
  %369 = vmatprep.subr.bf16.mxu0 0
  %370 = vmatpush1.bf16.msra.mxu0 %v267
  %371 = vmatprep.subr.bf16.mxu0 0
  %372 = vmatpush1.bf16.msra.mxu0 %v268
  %373 = vmatprep.subr.bf16.mxu0 0
  %374 = vmatpush1.bf16.msra.mxu0 %v269
  %375 = vmatprep.subr.bf16.mxu0 0
  %376 = vmatpush1.bf16.msra.mxu0 0
  %377 = vmatprep.subr.bf16.mxu0 0
  %378 = vmatpush1.bf16.msra.mxu0 0
  %379 = vmatprep.subr.bf16.mxu0 0
  %380 = vmatpush1.bf16.msra.mxu0 0
  %381 = vmatprep.subr.bf16.mxu0 0
  %382 = vmatpush1.bf16.msra.mxu0 0
  %383 = vmatprep.subr.bf16.mxu0 0
  %384 = vmatpush1.bf16.msra.mxu0 0
  %385 = vmatprep.subr.bf16.mxu0 0
  %386 = vmatpush1.bf16.msra.mxu0 0
  %387 = vmatprep.subr.bf16.mxu0 0
  %388 = vmatpush1.bf16.msra.mxu0 0
  %389 = vmatprep.subr.bf16.mxu0 0
  %390 = vmatpush1.bf16.msra.mxu0 0
  %391 = vmatprep.mubr.bf16.mxu0 0
  %392 = vmatmul.mubr.bf16.gmra.mrb[0].mxu0 %v128
  %v393 = vpop.f32.mrb[0].mxu0
  %v394 = vadd.f32 %v329, %v393
  %v395 = vpop.f32.mrb[0].mxu0
  %v396 = vpop.f32.mrb[0].mxu0
  %v397 = vadd.f32 %v332, %v396
  %v398 = vpop.f32.mrb[0].mxu0
  %399 = vmatprep.mubr.bf16.mxu0 0
  %400 = vmatmul.mubr.bf16.gmra.mrb[0].mxu0 %v131
  %v401 = vpop.f32.mrb[0].mxu0
  %v402 = vadd.f32 %v337, %v401
  %v403 = vpop.f32.mrb[0].mxu0
  %v404 = vpop.f32.mrb[0].mxu0
  %v405 = vadd.f32 %v340, %v404
  %v406 = vpop.f32.mrb[0].mxu0
  %407 = vmatprep.mubr.bf16.mxu0 0
  %408 = vmatmul.mubr.bf16.gmra.mrb[0].mxu0 %v134
  %v409 = vpop.f32.mrb[0].mxu0
  %v410 = vadd.f32 %v345, %v409
  %v411 = vpop.f32.mrb[0].mxu0
  %v412 = vpop.f32.mrb[0].mxu0
  %v413 = vadd.f32 %v348, %v412
  %v414 = vpop.f32.mrb[0].mxu0
  %415 = vmatprep.mubr.bf16.mxu0 0
  %416 = vmatmul.mubr.bf16.gmra.mrb[0].mxu0 %v137
  %v417 = vpop.f32.mrb[0].mxu0
  %v418 = vadd.f32 %v353, %v417
  %v419 = vpop.f32.mrb[0].mxu0
  %v420 = vpop.f32.mrb[0].mxu0
  %v421 = vadd.f32 %v356, %v420
  %v422 = vpop.f32.mrb[0].mxu0
  %423 = vdwg.mxu0
  %v424 = vmax.f32 %v394, 0.0
  %v425 = vmax.f32 %v397, 0.0
  %v426 = vmax.f32 %v402, 0.0
  %v427 = vmax.f32 %v405, 0.0
  %v428 = vmax.f32 %v410, 0.0
  %v429 = vmax.f32 %v413, 0.0
  %v430 = vmax.f32 %v418, 0.0
  %v431 = vmax.f32 %v421, 0.0
  %v432 = vpack.c.bf16 %v425, %v424
  %v433 = vpack.c.bf16 %v427, %v426
  %v434 = vpack.c.bf16 %v429, %v428
  %v435 = vpack.c.bf16 %v431, %v430
  %v440 = vunpack.c.l.b16 %v432
  %v441 = vunpack.c.h.b16 %v432
  %v442 = vunpack.c.l.b16 %v433
  %v443 = vunpack.c.h.b16 %v433
  %v444 = vunpack.c.l.b16 %v434
  %v445 = vunpack.c.h.b16 %v434
  %v446 = vunpack.c.l.b16 %v435
  %v447 = vunpack.c.h.b16 %v435
  %v448 = vpack.c.b16 %v440, %v440
  %v449 = vpack.c.b16 %v441, %v441
  %v450 = vpack.c.b16 %v442, %v442
  %v451 = vpack.c.b16 %v443, %v443
  %v452 = vpack.c.b16 %v444, %v444
  %v453 = vpack.c.b16 %v445, %v445
  %v454 = vpack.c.b16 %v446, %v446
  %v455 = vpack.c.b16 %v447, %v447
  %464 = vst [vmem:[%s3] sm:$0xf] %v448
  %465 = vst [vmem:[%s3 + $0x4] sm:$0xf] %v449
  %466 = vst [vmem:[%s3 + $0x8] sm:$0xf] %v450
  %467 = vst [vmem:[%s3 + $0xc] sm:$0xf] %v451
  %468 = vst [vmem:[%s3 + $0x10] sm:$0xf] %v452
  %469 = vst [vmem:[%s3 + $0x14] sm:$0xf] %v453
  %470 = vst [vmem:[%s3 + $0x18] sm:$0xf] %v454
  %471 = vst [vmem:[%s3 + $0x1c] sm:$0xf] %v455
  // Predicated region
  $region14: #{timm_forward_features.4} parent=0 // pred_check
    _
  $region15: #{timm_forward_features.4} parent=0 // pred_check_branch
    %473 = sbr.rel (0) target = $region17
  $region16: #{timm_forward_features.4} parent=0 // pred_region
    _
  $region17: #{timm_forward_features.4} parent=0 // pred_fallthru
    _
  // Predicated region
  $region18: #{timm_forward_features.4} parent=0 // pred_check
    _
  $region19: #{timm_forward_features.4} parent=0 // pred_check_branch
    %475 = sbr.rel (0) target = $region21
  $region20: #{timm_forward_features.4} parent=0 // pred_region
    _
  $region21: #{timm_forward_features.4} parent=0 // pred_fallthru
    _

// kernel: timm_forward_features.5
$region0: #{timm_forward_features.5}
  #allocation0 [shape = 'u32[]', space=smem, size = 0x4, offset = 0x4, fixed_abs, tag = 'smem constant byte address 0x4 - core index']
  #allocation1 [shape = 'u32[144,128]{1,0:T(1,128)}', space=vmem, size = 0x12000, scoped, tag = 'internal scratch']
  %s0 = inlined_call_operand.vmem [shape: bf16[64,640], index: 0, kind: input, shape index: {}]
  %s1 = inlined_call_operand.vmem [shape: bf16[640,128], index: 1, kind: input, shape index: {}]
  %s2 = inlined_call_operand.vmem [shape: f32[1,128], index: 2, kind: input, shape index: {}]
  %s3 = inlined_call_operand.vmem [shape: bf16[64,128], index: 3, kind: input, shape index: {}]
  %s4 = inlined_call_operand.vmem [shape: bf16[64,128], index: 4, kind: output, shape index: {}]
  %s5 = sld [smem:[#allocation0]]
  $region26: #{timm_forward_features.5} parent=0
    _
  %s7 = ssub.s32 1, %s5
  %s8 = scalar_select 0, %s7, %s5
  // Predicated region
  $region2: #{timm_forward_features.5} parent=0 // pred_check
    _
  $region3: #{timm_forward_features.5} parent=0 // pred_check_branch
    %10 = sbr.rel (0) target = $region5
  $region4: #{timm_forward_features.5} parent=0 // pred_region
    _
  $region5: #{timm_forward_features.5} parent=0 // pred_fallthru
    _
  // Predicated region
  $region6: #{timm_forward_features.5} parent=0 // pred_check
    _
  $region7: #{timm_forward_features.5} parent=0 // pred_check_branch
    %12 = sbr.rel (0) target = $region9
  $region8: #{timm_forward_features.5} parent=0 // pred_region
    _
  $region9: #{timm_forward_features.5} parent=0 // pred_fallthru
    _
  // Predicated region
  $region10: #{timm_forward_features.5} parent=0 // pred_check
    _
  $region11: #{timm_forward_features.5} parent=0 // pred_check_branch
    %14 = sbr.rel (0) target = $region13
  $region12: #{timm_forward_features.5} parent=0 // pred_region
    _
  $region13: #{timm_forward_features.5} parent=0 // pred_fallthru
    _
  // Predicated region
  $region14: #{timm_forward_features.5} parent=0 // pred_check
    _
  $region15: #{timm_forward_features.5} parent=0 // pred_check_branch
    %16 = sbr.rel (0) target = $region17
  $region16: #{timm_forward_features.5} parent=0 // pred_region
    _
  $region17: #{timm_forward_features.5} parent=0 // pred_fallthru
    _
  %v18 = vld [vmem:[%s0] sm:$0xff]
  %v19 = vld [vmem:[%s0 + $0x8] sm:$0xff]
  %v20 = vld [vmem:[%s0 + $0x10] sm:$0xf]
  %v21 = vld [vmem:[%s0 + $0x14] sm:$0xff]
  %v22 = vld [vmem:[%s0 + $0x1c] sm:$0xff]
  %v23 = vld [vmem:[%s0 + $0x24] sm:$0xf]
  %v24 = vld [vmem:[%s0 + $0x28] sm:$0xff]
  %v25 = vld [vmem:[%s0 + $0x30] sm:$0xff]
  %v26 = vld [vmem:[%s0 + $0x38] sm:$0xf]
  %v27 = vld [vmem:[%s0 + $0x3c] sm:$0xff]
  %v28 = vld [vmem:[%s0 + $0x44] sm:$0xff]
  %v29 = vld [vmem:[%s0 + $0x4c] sm:$0xf]
  %v30 = vld [vmem:[%s0 + $0x50] sm:$0xff]
  %v31 = vld [vmem:[%s0 + $0x58] sm:$0xff]
  %v32 = vld [vmem:[%s0 + $0x60] sm:$0xf]
  %v33 = vld [vmem:[%s0 + $0x64] sm:$0xff]
  %v34 = vld [vmem:[%s0 + $0x6c] sm:$0xff]
  %v35 = vld [vmem:[%s0 + $0x74] sm:$0xf]
  %v36 = vld [vmem:[%s0 + $0x78] sm:$0xff]
  %v37 = vld [vmem:[%s0 + $0x80] sm:$0xff]
  %v38 = vld [vmem:[%s0 + $0x88] sm:$0xf]
  %v39 = vld [vmem:[%s0 + $0x8c] sm:$0xff]
  %v40 = vld [vmem:[%s0 + $0x94] sm:$0xff]
  %v41 = vld [vmem:[%s0 + $0x9c] sm:$0xf]
  %v42 = vld [vmem:[%s1] sm:$0xf]
  %v43 = vld [vmem:[%s1 + $0x4] sm:$0xf]
  %v44 = vld [vmem:[%s1 + $0x8] sm:$0xf]
  %v45 = vld [vmem:[%s1 + $0xc] sm:$0xf]
  %v46 = vld [vmem:[%s1 + $0x10] sm:$0xf]
  %v47 = vld [vmem:[%s1 + $0x14] sm:$0xf]
  %v48 = vld [vmem:[%s1 + $0x18] sm:$0xf]
  %v49 = vld [vmem:[%s1 + $0x1c] sm:$0xf]
  %v50 = vld [vmem:[%s1 + $0x20] sm:$0xf]
  %v51 = vld [vmem:[%s1 + $0x24] sm:$0xf]
  %v52 = vld [vmem:[%s1 + $0x28] sm:$0xf]
  %v53 = vld [vmem:[%s1 + $0x2c] sm:$0xf]
  %v54 = vld [vmem:[%s1 + $0x30] sm:$0xf]
  %v55 = vld [vmem:[%s1 + $0x34] sm:$0xf]
  %v56 = vld [vmem:[%s1 + $0x38] sm:$0xf]
  %v57 = vld [vmem:[%s1 + $0x3c] sm:$0xf]
  %v58 = vld [vmem:[%s1 + $0x40] sm:$0xf]
  %v59 = vld [vmem:[%s1 + $0x44] sm:$0xf]
  %v60 = vld [vmem:[%s1 + $0x48] sm:$0xf]
  %v61 = vld [vmem:[%s1 + $0x4c] sm:$0xf]
  %v62 = vld [vmem:[%s1 + $0x50] sm:$0xf]
  %v63 = vld [vmem:[%s1 + $0x54] sm:$0xf]
  %v64 = vld [vmem:[%s1 + $0x58] sm:$0xf]
  %v65 = vld [vmem:[%s1 + $0x5c] sm:$0xf]
  %v66 = vld [vmem:[%s1 + $0x60] sm:$0xf]
  %v67 = vld [vmem:[%s1 + $0x64] sm:$0xf]
  %v68 = vld [vmem:[%s1 + $0x68] sm:$0xf]
  %v69 = vld [vmem:[%s1 + $0x6c] sm:$0xf]
  %v70 = vld [vmem:[%s1 + $0x70] sm:$0xf]
  %v71 = vld [vmem:[%s1 + $0x74] sm:$0xf]
  %v72 = vld [vmem:[%s1 + $0x78] sm:$0xf]
  %v73 = vld [vmem:[%s1 + $0x7c] sm:$0xf]
  %v74 = vld [vmem:[%s1 + $0x80] sm:$0xf]
  %v75 = vld [vmem:[%s1 + $0x84] sm:$0xf]
  %v76 = vld [vmem:[%s1 + $0x88] sm:$0xf]
  %v77 = vld [vmem:[%s1 + $0x8c] sm:$0xf]
  %v78 = vld [vmem:[%s1 + $0x90] sm:$0xf]
  %v79 = vld [vmem:[%s1 + $0x94] sm:$0xf]
  %v80 = vld [vmem:[%s1 + $0x98] sm:$0xf]
  %v81 = vld [vmem:[%s1 + $0x9c] sm:$0xf]
  %v82 = vld [vmem:[%s1 + $0xa0] sm:$0xf]
  %v83 = vld [vmem:[%s1 + $0xa4] sm:$0xf]
  %v84 = vld [vmem:[%s1 + $0xa8] sm:$0xf]
  %v85 = vld [vmem:[%s1 + $0xac] sm:$0xf]
  %v86 = vld [vmem:[%s1 + $0xb0] sm:$0xf]
  %v87 = vld [vmem:[%s1 + $0xb4] sm:$0xf]
  %v88 = vld [vmem:[%s1 + $0xb8] sm:$0xf]
  %v89 = vld [vmem:[%s1 + $0xbc] sm:$0xf]
  %v90 = vld [vmem:[%s1 + $0xc0] sm:$0xf]
  %v91 = vld [vmem:[%s1 + $0xc4] sm:$0xf]
  %v92 = vld [vmem:[%s1 + $0xc8] sm:$0xf]
  %v93 = vld [vmem:[%s1 + $0xcc] sm:$0xf]
  %v94 = vld [vmem:[%s1 + $0xd0] sm:$0xf]
  %v95 = vld [vmem:[%s1 + $0xd4] sm:$0xf]
  %v96 = vld [vmem:[%s1 + $0xd8] sm:$0xf]
  %v97 = vld [vmem:[%s1 + $0xdc] sm:$0xf]
  %v98 = vld [vmem:[%s1 + $0xe0] sm:$0xf]
  %v99 = vld [vmem:[%s1 + $0xe4] sm:$0xf]
  %v100 = vld [vmem:[%s1 + $0xe8] sm:$0xf]
  %v101 = vld [vmem:[%s1 + $0xec] sm:$0xf]
  %v102 = vld [vmem:[%s1 + $0xf0] sm:$0xf]
  %v103 = vld [vmem:[%s1 + $0xf4] sm:$0xf]
  %v104 = vld [vmem:[%s1 + $0xf8] sm:$0xf]
  %v105 = vld [vmem:[%s1 + $0xfc] sm:$0xf]
  %v106 = vld [vmem:[%s1 + $0x100] sm:$0xf]
  %v107 = vld [vmem:[%s1 + $0x104] sm:$0xf]
  %v108 = vld [vmem:[%s1 + $0x108] sm:$0xf]
  %v109 = vld [vmem:[%s1 + $0x10c] sm:$0xf]
  %v110 = vld [vmem:[%s1 + $0x110] sm:$0xf]
  %v111 = vld [vmem:[%s1 + $0x114] sm:$0xf]
  %v112 = vld [vmem:[%s1 + $0x118] sm:$0xf]
  %v113 = vld [vmem:[%s1 + $0x11c] sm:$0xf]
  %v114 = vld [vmem:[%s1 + $0x120] sm:$0xf]
  %v115 = vld [vmem:[%s1 + $0x124] sm:$0xf]
  %v116 = vld [vmem:[%s1 + $0x128] sm:$0xf]
  %v117 = vld [vmem:[%s1 + $0x12c] sm:$0xf]
  %v118 = vld [vmem:[%s1 + $0x130] sm:$0xf]
  %v119 = vld [vmem:[%s1 + $0x134] sm:$0xf]
  %v120 = vld [vmem:[%s1 + $0x138] sm:$0xf]
  %v121 = vld [vmem:[%s1 + $0x13c] sm:$0xf]
  %v122 = vld [vmem:[%s2] sm:$0x1]
  %v124 = vlaneseq
  %v125 = vshrl.u32 %v124, 7
  %v126 = vsub.s32 0, %v125
  %v127 = vrot.slane %v122, %v126
  %v153 = vunpack.c.l.b16 %v18
  %v154 = vunpack.c.h.b16 %v18
  %v155 = vunpack.c.l.b16 %v19
  %v156 = vunpack.c.h.b16 %v19
  %v157 = vunpack.c.l.b16 %v20
  %v158 = vunpack.c.l.b16 %v21
  %v159 = vunpack.c.h.b16 %v21
  %v160 = vunpack.c.l.b16 %v22
  %v161 = vunpack.c.h.b16 %v22
  %v162 = vunpack.c.l.b16 %v23
  %v163 = vunpack.c.l.b16 %v24
  %v164 = vunpack.c.h.b16 %v24
  %v165 = vunpack.c.l.b16 %v25
  %v166 = vunpack.c.h.b16 %v25
  %v167 = vunpack.c.l.b16 %v26
  %v168 = vunpack.c.l.b16 %v27
  %v169 = vunpack.c.h.b16 %v27
  %v170 = vunpack.c.l.b16 %v28
  %v171 = vunpack.c.h.b16 %v28
  %v172 = vunpack.c.l.b16 %v29
  %v173 = vunpack.c.l.b16 %v30
  %v174 = vunpack.c.h.b16 %v30
  %v175 = vunpack.c.l.b16 %v31
  %v176 = vunpack.c.h.b16 %v31
  %v177 = vunpack.c.l.b16 %v32
  %v178 = vunpack.c.l.b16 %v33
  %v179 = vunpack.c.h.b16 %v33
  %v180 = vunpack.c.l.b16 %v34
  %v181 = vunpack.c.h.b16 %v34
  %v182 = vunpack.c.l.b16 %v35
  %v183 = vunpack.c.l.b16 %v36
  %v184 = vunpack.c.h.b16 %v36
  %v185 = vunpack.c.l.b16 %v37
  %v186 = vunpack.c.h.b16 %v37
  %v187 = vunpack.c.l.b16 %v38
  %v188 = vunpack.c.l.b16 %v39
  %v189 = vunpack.c.h.b16 %v39
  %v190 = vunpack.c.l.b16 %v40
  %v191 = vunpack.c.h.b16 %v40
  %v192 = vunpack.c.l.b16 %v41
  %v193 = vpack.c.b16 %v158, %v153
  %v194 = vpack.c.b16 %v159, %v154
  %v195 = vpack.c.b16 %v160, %v155
  %v196 = vpack.c.b16 %v161, %v156
  %v197 = vpack.c.b16 %v162, %v157
  %v198 = vpack.c.b16 %v168, %v163
  %v199 = vpack.c.b16 %v169, %v164
  %v200 = vpack.c.b16 %v170, %v165
  %v201 = vpack.c.b16 %v171, %v166
  %v202 = vpack.c.b16 %v172, %v167
  %v203 = vpack.c.b16 %v178, %v173
  %v204 = vpack.c.b16 %v179, %v174
  %v205 = vpack.c.b16 %v180, %v175
  %v206 = vpack.c.b16 %v181, %v176
  %v207 = vpack.c.b16 %v182, %v177
  %v208 = vpack.c.b16 %v188, %v183
  %v209 = vpack.c.b16 %v189, %v184
  %v210 = vpack.c.b16 %v190, %v185
  %v211 = vpack.c.b16 %v191, %v186
  %v212 = vpack.c.b16 %v192, %v187
  %v313 = vunpack.c.l.b16 %v42
  %v314 = vunpack.c.l.b16 %v43
  %v315 = vunpack.c.l.b16 %v44
  %v316 = vunpack.c.l.b16 %v45
  %v317 = vunpack.c.l.b16 %v46
  %v318 = vunpack.c.l.b16 %v47
  %v319 = vunpack.c.l.b16 %v48
  %v320 = vunpack.c.l.b16 %v49
  %v321 = vunpack.c.l.b16 %v50
  %v322 = vunpack.c.l.b16 %v51
  %v323 = vunpack.c.l.b16 %v52
  %v324 = vunpack.c.l.b16 %v53
  %v325 = vunpack.c.l.b16 %v54
  %v326 = vunpack.c.l.b16 %v55
  %v327 = vunpack.c.l.b16 %v56
  %v328 = vunpack.c.l.b16 %v57
  %v329 = vunpack.c.l.b16 %v58
  %v330 = vunpack.c.l.b16 %v59
  %v331 = vunpack.c.l.b16 %v60
  %v332 = vunpack.c.l.b16 %v61
  %v333 = vunpack.c.l.b16 %v62
  %v334 = vunpack.c.l.b16 %v63
  %v335 = vunpack.c.l.b16 %v64
  %v336 = vunpack.c.l.b16 %v65
  %v337 = vunpack.c.l.b16 %v66
  %v338 = vunpack.c.l.b16 %v67
  %v339 = vunpack.c.l.b16 %v68
  %v340 = vunpack.c.l.b16 %v69
  %v341 = vunpack.c.l.b16 %v70
  %v342 = vunpack.c.l.b16 %v71
  %v343 = vunpack.c.l.b16 %v72
  %v344 = vunpack.c.l.b16 %v73
  %v345 = vunpack.c.l.b16 %v74
  %v346 = vunpack.c.l.b16 %v75
  %v347 = vunpack.c.l.b16 %v76
  %v348 = vunpack.c.l.b16 %v77
  %v349 = vunpack.c.l.b16 %v78
  %v350 = vunpack.c.l.b16 %v79
  %v351 = vunpack.c.l.b16 %v80
  %v352 = vunpack.c.l.b16 %v81
  %v353 = vunpack.c.l.b16 %v82
  %v354 = vunpack.c.l.b16 %v83
  %v355 = vunpack.c.l.b16 %v84
  %v356 = vunpack.c.l.b16 %v85
  %v357 = vunpack.c.l.b16 %v86
  %v358 = vunpack.c.l.b16 %v87
  %v359 = vunpack.c.l.b16 %v88
  %v360 = vunpack.c.l.b16 %v89
  %v361 = vunpack.c.l.b16 %v90
  %v362 = vunpack.c.l.b16 %v91
  %v363 = vunpack.c.l.b16 %v92
  %v364 = vunpack.c.l.b16 %v93
  %v365 = vunpack.c.l.b16 %v94
  %v366 = vunpack.c.l.b16 %v95
  %v367 = vunpack.c.l.b16 %v96
  %v368 = vunpack.c.l.b16 %v97
  %v369 = vunpack.c.l.b16 %v98
  %v370 = vunpack.c.l.b16 %v99
  %v371 = vunpack.c.l.b16 %v100
  %v372 = vunpack.c.l.b16 %v101
  %v373 = vunpack.c.l.b16 %v102
  %v374 = vunpack.c.l.b16 %v103
  %v375 = vunpack.c.l.b16 %v104
  %v376 = vunpack.c.l.b16 %v105
  %v377 = vunpack.c.l.b16 %v106
  %v378 = vunpack.c.l.b16 %v107
  %v379 = vunpack.c.l.b16 %v108
  %v380 = vunpack.c.l.b16 %v109
  %v381 = vunpack.c.l.b16 %v110
  %v382 = vunpack.c.l.b16 %v111
  %v383 = vunpack.c.l.b16 %v112
  %v384 = vunpack.c.l.b16 %v113
  %v385 = vunpack.c.l.b16 %v114
  %v386 = vunpack.c.l.b16 %v115
  %v387 = vunpack.c.l.b16 %v116
  %v388 = vunpack.c.l.b16 %v117
  %v389 = vunpack.c.l.b16 %v118
  %v390 = vunpack.c.l.b16 %v119
  %v391 = vunpack.c.l.b16 %v120
  %v392 = vunpack.c.l.b16 %v121
  %v393 = vpack.c.b16 %v314, %v313
  %v394 = vpack.c.b16 %v316, %v315
  %v395 = vpack.c.b16 %v318, %v317
  %v396 = vpack.c.b16 %v320, %v319
  %v397 = vpack.c.b16 %v322, %v321
  %v398 = vpack.c.b16 %v324, %v323
  %v399 = vpack.c.b16 %v326, %v325
  %v400 = vpack.c.b16 %v328, %v327
  %v401 = vpack.c.b16 %v330, %v329
  %v402 = vpack.c.b16 %v332, %v331
  %v403 = vpack.c.b16 %v334, %v333
  %v404 = vpack.c.b16 %v336, %v335
  %v405 = vpack.c.b16 %v338, %v337
  %v406 = vpack.c.b16 %v340, %v339
  %v407 = vpack.c.b16 %v342, %v341
  %v408 = vpack.c.b16 %v344, %v343
  %v409 = vpack.c.b16 %v346, %v345
  %v410 = vpack.c.b16 %v348, %v347
  %v411 = vpack.c.b16 %v350, %v349
  %v412 = vpack.c.b16 %v352, %v351
  %v413 = vpack.c.b16 %v354, %v353
  %v414 = vpack.c.b16 %v356, %v355
  %v415 = vpack.c.b16 %v358, %v357
  %v416 = vpack.c.b16 %v360, %v359
  %v417 = vpack.c.b16 %v362, %v361
  %v418 = vpack.c.b16 %v364, %v363
  %v419 = vpack.c.b16 %v366, %v365
  %v420 = vpack.c.b16 %v368, %v367
  %v421 = vpack.c.b16 %v370, %v369
  %v422 = vpack.c.b16 %v372, %v371
  %v423 = vpack.c.b16 %v374, %v373
  %v424 = vpack.c.b16 %v376, %v375
  %v425 = vpack.c.b16 %v378, %v377
  %v426 = vpack.c.b16 %v380, %v379
  %v427 = vpack.c.b16 %v382, %v381
  %v428 = vpack.c.b16 %v384, %v383
  %v429 = vpack.c.b16 %v386, %v385
  %v430 = vpack.c.b16 %v388, %v387
  %v431 = vpack.c.b16 %v390, %v389
  %v432 = vpack.c.b16 %v392, %v391
  %473 = vmatprep.subr.bf16.mxu0 0
  %474 = vmatpush1.bf16.msra.mxu0 %v393
  %475 = vmatprep.subr.bf16.mxu0 0
  %476 = vmatpush1.bf16.msra.mxu0 %v394
  %477 = vmatprep.subr.bf16.mxu0 0
  %478 = vmatpush1.bf16.msra.mxu0 %v395
  %479 = vmatprep.subr.bf16.mxu0 0
  %480 = vmatpush1.bf16.msra.mxu0 %v396
  %481 = vmatprep.subr.bf16.mxu0 0
  %482 = vmatpush1.bf16.msra.mxu0 %v397
  %483 = vmatprep.subr.bf16.mxu0 0
  %484 = vmatpush1.bf16.msra.mxu0 %v398
  %485 = vmatprep.subr.bf16.mxu0 0
  %486 = vmatpush1.bf16.msra.mxu0 %v399
  %487 = vmatprep.subr.bf16.mxu0 0
  %488 = vmatpush1.bf16.msra.mxu0 %v400
  %489 = vmatprep.subr.bf16.mxu0 0
  %490 = vmatpush1.bf16.msra.mxu0 %v401
  %491 = vmatprep.subr.bf16.mxu0 0
  %492 = vmatpush1.bf16.msra.mxu0 %v402
  %493 = vmatprep.subr.bf16.mxu0 0
  %494 = vmatpush1.bf16.msra.mxu0 %v403
  %495 = vmatprep.subr.bf16.mxu0 0
  %496 = vmatpush1.bf16.msra.mxu0 %v404
  %497 = vmatprep.subr.bf16.mxu0 0
  %498 = vmatpush1.bf16.msra.mxu0 %v405
  %499 = vmatprep.subr.bf16.mxu0 0
  %500 = vmatpush1.bf16.msra.mxu0 %v406
  %501 = vmatprep.subr.bf16.mxu0 0
  %502 = vmatpush1.bf16.msra.mxu0 %v407
  %503 = vmatprep.subr.bf16.mxu0 0
  %504 = vmatpush1.bf16.msra.mxu0 %v408
  %505 = vmatprep.mubr.bf16.mxu0 %v194
  %506 = vmatmul.mubr.bf16.gmra.mrb[0].mxu0 %v193
  %v507 = vpop.f32.mrb[0].mxu0
  %v508 = vadd.f32 %v127, %v507
  %v509 = vpop.f32.mrb[0].mxu0
  %v510 = vpop.f32.mrb[0].mxu0
  %v511 = vadd.f32 %v127, %v510
  %v512 = vpop.f32.mrb[0].mxu0
  %513 = vmatprep.mubr.bf16.mxu0 %v199
  %514 = vmatmul.mubr.bf16.gmra.mrb[0].mxu0 %v198
  %v515 = vpop.f32.mrb[0].mxu0
  %v516 = vadd.f32 %v127, %v515
  %v517 = vpop.f32.mrb[0].mxu0
  %v518 = vpop.f32.mrb[0].mxu0
  %v519 = vadd.f32 %v127, %v518
  %v520 = vpop.f32.mrb[0].mxu0
  %521 = vmatprep.mubr.bf16.mxu0 %v204
  %522 = vmatmul.mubr.bf16.gmra.mrb[0].mxu0 %v203
  %v523 = vpop.f32.mrb[0].mxu0
  %v524 = vadd.f32 %v127, %v523
  %v525 = vpop.f32.mrb[0].mxu0
  %v526 = vpop.f32.mrb[0].mxu0
  %v527 = vadd.f32 %v127, %v526
  %v528 = vpop.f32.mrb[0].mxu0
  %529 = vmatprep.mubr.bf16.mxu0 %v209
  %530 = vmatmul.mubr.bf16.gmra.mrb[0].mxu0 %v208
  %v531 = vpop.f32.mrb[0].mxu0
  %v532 = vadd.f32 %v127, %v531
  %v533 = vpop.f32.mrb[0].mxu0
  %v534 = vpop.f32.mrb[0].mxu0
  %v535 = vadd.f32 %v127, %v534
  %v536 = vpop.f32.mrb[0].mxu0
  %537 = vdwg.mxu0
  %538 = vmatprep.subr.bf16.mxu0 0
  %539 = vmatpush1.bf16.msra.mxu0 %v409
  %540 = vmatprep.subr.bf16.mxu0 0
  %541 = vmatpush1.bf16.msra.mxu0 %v410
  %542 = vmatprep.subr.bf16.mxu0 0
  %543 = vmatpush1.bf16.msra.mxu0 %v411
  %544 = vmatprep.subr.bf16.mxu0 0
  %545 = vmatpush1.bf16.msra.mxu0 %v412
  %546 = vmatprep.subr.bf16.mxu0 0
  %547 = vmatpush1.bf16.msra.mxu0 %v413
  %548 = vmatprep.subr.bf16.mxu0 0
  %549 = vmatpush1.bf16.msra.mxu0 %v414
  %550 = vmatprep.subr.bf16.mxu0 0
  %551 = vmatpush1.bf16.msra.mxu0 %v415
  %552 = vmatprep.subr.bf16.mxu0 0
  %553 = vmatpush1.bf16.msra.mxu0 %v416
  %554 = vmatprep.subr.bf16.mxu0 0
  %555 = vmatpush1.bf16.msra.mxu0 %v417
  %556 = vmatprep.subr.bf16.mxu0 0
  %557 = vmatpush1.bf16.msra.mxu0 %v418
  %558 = vmatprep.subr.bf16.mxu0 0
  %559 = vmatpush1.bf16.msra.mxu0 %v419
  %560 = vmatprep.subr.bf16.mxu0 0
  %561 = vmatpush1.bf16.msra.mxu0 %v420
  %562 = vmatprep.subr.bf16.mxu0 0
  %563 = vmatpush1.bf16.msra.mxu0 %v421
  %564 = vmatprep.subr.bf16.mxu0 0
  %565 = vmatpush1.bf16.msra.mxu0 %v422
  %566 = vmatprep.subr.bf16.mxu0 0
  %567 = vmatpush1.bf16.msra.mxu0 %v423
  %568 = vmatprep.subr.bf16.mxu0 0
  %569 = vmatpush1.bf16.msra.mxu0 %v424
  %570 = vmatprep.mubr.bf16.mxu0 %v196
  %571 = vmatmul.mubr.bf16.gmra.mrb[0].mxu0 %v195
  %v572 = vpop.f32.mrb[0].mxu0
  %v573 = vadd.f32 %v508, %v572
  %v574 = vpop.f32.mrb[0].mxu0
  %v575 = vpop.f32.mrb[0].mxu0
  %v576 = vadd.f32 %v511, %v575
  %v577 = vpop.f32.mrb[0].mxu0
  %578 = vmatprep.mubr.bf16.mxu0 %v201
  %579 = vmatmul.mubr.bf16.gmra.mrb[0].mxu0 %v200
  %v580 = vpop.f32.mrb[0].mxu0
  %v581 = vadd.f32 %v516, %v580
  %v582 = vpop.f32.mrb[0].mxu0
  %v583 = vpop.f32.mrb[0].mxu0
  %v584 = vadd.f32 %v519, %v583
  %v585 = vpop.f32.mrb[0].mxu0
  %586 = vmatprep.mubr.bf16.mxu0 %v206
  %587 = vmatmul.mubr.bf16.gmra.mrb[0].mxu0 %v205
  %v588 = vpop.f32.mrb[0].mxu0
  %v589 = vadd.f32 %v524, %v588
  %v590 = vpop.f32.mrb[0].mxu0
  %v591 = vpop.f32.mrb[0].mxu0
  %v592 = vadd.f32 %v527, %v591
  %v593 = vpop.f32.mrb[0].mxu0
  %594 = vmatprep.mubr.bf16.mxu0 %v211
  %595 = vmatmul.mubr.bf16.gmra.mrb[0].mxu0 %v210
  %v596 = vpop.f32.mrb[0].mxu0
  %v597 = vadd.f32 %v532, %v596
  %v598 = vpop.f32.mrb[0].mxu0
  %v599 = vpop.f32.mrb[0].mxu0
  %v600 = vadd.f32 %v535, %v599
  %v601 = vpop.f32.mrb[0].mxu0
  %602 = vdwg.mxu0
  %603 = vmatprep.subr.bf16.mxu0 0
  %604 = vmatpush1.bf16.msra.mxu0 %v425
  %605 = vmatprep.subr.bf16.mxu0 0
  %606 = vmatpush1.bf16.msra.mxu0 %v426
  %607 = vmatprep.subr.bf16.mxu0 0
  %608 = vmatpush1.bf16.msra.mxu0 %v427
  %609 = vmatprep.subr.bf16.mxu0 0
  %610 = vmatpush1.bf16.msra.mxu0 %v428
  %611 = vmatprep.subr.bf16.mxu0 0
  %612 = vmatpush1.bf16.msra.mxu0 %v429
  %613 = vmatprep.subr.bf16.mxu0 0
  %614 = vmatpush1.bf16.msra.mxu0 %v430
  %615 = vmatprep.subr.bf16.mxu0 0
  %616 = vmatpush1.bf16.msra.mxu0 %v431
  %617 = vmatprep.subr.bf16.mxu0 0
  %618 = vmatpush1.bf16.msra.mxu0 %v432
  %619 = vmatprep.subr.bf16.mxu0 0
  %620 = vmatpush1.bf16.msra.mxu0 0
  %621 = vmatprep.subr.bf16.mxu0 0
  %622 = vmatpush1.bf16.msra.mxu0 0
  %623 = vmatprep.subr.bf16.mxu0 0
  %624 = vmatpush1.bf16.msra.mxu0 0
  %625 = vmatprep.subr.bf16.mxu0 0
  %626 = vmatpush1.bf16.msra.mxu0 0
  %627 = vmatprep.subr.bf16.mxu0 0
  %628 = vmatpush1.bf16.msra.mxu0 0
  %629 = vmatprep.subr.bf16.mxu0 0
  %630 = vmatpush1.bf16.msra.mxu0 0
  %631 = vmatprep.subr.bf16.mxu0 0
  %632 = vmatpush1.bf16.msra.mxu0 0
  %633 = vmatprep.subr.bf16.mxu0 0
  %634 = vmatpush1.bf16.msra.mxu0 0
  %635 = vmatprep.mubr.bf16.mxu0 0
  %636 = vmatmul.mubr.bf16.gmra.mrb[0].mxu0 %v197
  %v637 = vpop.f32.mrb[0].mxu0
  %v638 = vadd.f32 %v573, %v637
  %v639 = vpop.f32.mrb[0].mxu0
  %v640 = vpop.f32.mrb[0].mxu0
  %v641 = vadd.f32 %v576, %v640
  %v642 = vpop.f32.mrb[0].mxu0
  %643 = vmatprep.mubr.bf16.mxu0 0
  %644 = vmatmul.mubr.bf16.gmra.mrb[0].mxu0 %v202
  %v645 = vpop.f32.mrb[0].mxu0
  %v646 = vadd.f32 %v581, %v645
  %v647 = vpop.f32.mrb[0].mxu0
  %v648 = vpop.f32.mrb[0].mxu0
  %v649 = vadd.f32 %v584, %v648
  %v650 = vpop.f32.mrb[0].mxu0
  %651 = vmatprep.mubr.bf16.mxu0 0
  %652 = vmatmul.mubr.bf16.gmra.mrb[0].mxu0 %v207
  %v653 = vpop.f32.mrb[0].mxu0
  %v654 = vadd.f32 %v589, %v653
  %v655 = vpop.f32.mrb[0].mxu0
  %v656 = vpop.f32.mrb[0].mxu0
  %v657 = vadd.f32 %v592, %v656
  %v658 = vpop.f32.mrb[0].mxu0
  %659 = vmatprep.mubr.bf16.mxu0 0
  %660 = vmatmul.mubr.bf16.gmra.mrb[0].mxu0 %v212
  %v661 = vpop.f32.mrb[0].mxu0
  %v662 = vadd.f32 %v597, %v661
  %v663 = vpop.f32.mrb[0].mxu0
  %v664 = vpop.f32.mrb[0].mxu0
  %v665 = vadd.f32 %v600, %v664
  %v666 = vpop.f32.mrb[0].mxu0
  %667 = vdwg.mxu0
  %v668 = vld [vmem:[%s3] sm:$0xf]
  %v669 = vld [vmem:[%s3 + $0x4] sm:$0xf]
  %v670 = vld [vmem:[%s3 + $0x8] sm:$0xf]
  %v671 = vld [vmem:[%s3 + $0xc] sm:$0xf]
  %v672 = vld [vmem:[%s3 + $0x10] sm:$0xf]
  %v673 = vld [vmem:[%s3 + $0x14] sm:$0xf]
  %v674 = vld [vmem:[%s3 + $0x18] sm:$0xf]
  %v675 = vld [vmem:[%s3 + $0x1c] sm:$0xf]
  %v676 = vunpack.c.l.bf16 %v668
  %v677 = vunpack.c.l.bf16 %v669
  %v678 = vunpack.c.l.bf16 %v670
  %v679 = vunpack.c.l.bf16 %v671
  %v680 = vunpack.c.l.bf16 %v672
  %v681 = vunpack.c.l.bf16 %v673
  %v682 = vunpack.c.l.bf16 %v674
  %v683 = vunpack.c.l.bf16 %v675
  %v684 = vadd.f32 %v638, %v676
  %v685 = vadd.f32 %v641, %v677
  %v686 = vadd.f32 %v646, %v678
  %v687 = vadd.f32 %v649, %v679
  %v688 = vadd.f32 %v654, %v680
  %v689 = vadd.f32 %v657, %v681
  %v690 = vadd.f32 %v662, %v682
  %v691 = vadd.f32 %v665, %v683
  %v692 = vmax.f32 %v684, 0.0
  %v693 = vmax.f32 %v685, 0.0
  %v694 = vmax.f32 %v686, 0.0
  %v695 = vmax.f32 %v687, 0.0
  %v696 = vmax.f32 %v688, 0.0
  %v697 = vmax.f32 %v689, 0.0
  %v698 = vmax.f32 %v690, 0.0
  %v699 = vmax.f32 %v691, 0.0
  %v700 = vpack.c.bf16 %v693, %v692
  %v701 = vpack.c.bf16 %v695, %v694
  %v702 = vpack.c.bf16 %v697, %v696
  %v703 = vpack.c.bf16 %v699, %v698
  %v708 = vunpack.c.l.b16 %v700
  %v709 = vunpack.c.h.b16 %v700
  %v710 = vunpack.c.l.b16 %v701
  %v711 = vunpack.c.h.b16 %v701
  %v712 = vunpack.c.l.b16 %v702
  %v713 = vunpack.c.h.b16 %v702
  %v714 = vunpack.c.l.b16 %v703
  %v715 = vunpack.c.h.b16 %v703
  %v716 = vpack.c.b16 %v708, %v708
  %v717 = vpack.c.b16 %v709, %v709
  %v718 = vpack.c.b16 %v710, %v710
  %v719 = vpack.c.b16 %v711, %v711
  %v720 = vpack.c.b16 %v712, %v712
  %v721 = vpack.c.b16 %v713, %v713
  %v722 = vpack.c.b16 %v714, %v714
  %v723 = vpack.c.b16 %v715, %v715
  %732 = vst [vmem:[%s4] sm:$0xf] %v716
  %733 = vst [vmem:[%s4 + $0x4] sm:$0xf] %v717
  %734 = vst [vmem:[%s4 + $0x8] sm:$0xf] %v718
  %735 = vst [vmem:[%s4 + $0xc] sm:$0xf] %v719
  %736 = vst [vmem:[%s4 + $0x10] sm:$0xf] %v720
  %737 = vst [vmem:[%s4 + $0x14] sm:$0xf] %v721
  %738 = vst [vmem:[%s4 + $0x18] sm:$0xf] %v722
  %739 = vst [vmem:[%s4 + $0x1c] sm:$0xf] %v723
  // Predicated region
  $region18: #{timm_forward_features.5} parent=0 // pred_check
    _
  $region19: #{timm_forward_features.5} parent=0 // pred_check_branch
    %741 = sbr.rel (0) target = $region21
  $region20: #{timm_forward_features.5} parent=0 // pred_region
    _
  $region21: #{timm_forward_features.5} parent=0 // pred_fallthru
    _
  // Predicated region
  $region22: #{timm_forward_features.5} parent=0 // pred_check
    _
  $region23: #{timm_forward_features.5} parent=0 // pred_check_branch
    %743 = sbr.rel (0) target = $region25
  $region24: #{timm_forward_features.5} parent=0 // pred_region
    _
  $region25: #{timm_forward_features.5} parent=0 // pred_fallthru
    _

</llo_original>
